<compile_context>
chip_gen: v7x
topology: tpu7x:2x2x1
jax: 0.10.0
libtpu: 0.0.40
codegen_flags: <defaults>
</compile_context>

<pallas_src>
import jax
import jax.numpy as jnp
from jax import lax
from jax.experimental import pallas as pl
from jax.experimental.pallas import tpu as pltpu

# ---------------- problem sizes (small, deterministic) ----------------
B = 4            # independent graphs
N = 16           # nodes per graph (power of two -> shift instead of vector div)
E = 48           # edges per graph
C = 8            # in_chnls == base_chnls (residual add requires equality)
ED = 4           # edge_attr dim
H = 16           # hidden width of the edge MLP
EPS = 1e-5

GRAPHS_PER_BLOCK = 2   # 2 grid steps -> both TensorCores on v7x; set to B on v5e/v6e.

# packed-parameter layout: one [PR, PC] f32 buffer (blocks 8-row aligned)
_R_W1, _R_B1, _R_W2, _R_B2 = 0, 8, 16, 32
_R_TH, _R_RB, _R_GA, _R_BE = 40, 48, 49, 50
_R_Q, _R_R = 56, 64           # hoisted constants Q [C, C*C], R [C*C, C]
PR, PC = 128, C * C


def res_graph_conv_kernel(tgt_ref, x_ref, eap_ref, p_ref, out_ref):
    GN = x_ref.shape[0]                 # graphs_per_block * N   (stacked nodes)
    GE = eap_ref.shape[0]               # graphs_per_block * E   (stacked edges)

    x = x_ref[...]                                             # [GN, C]
    ea = eap_ref[:, 0:ED]                                      # [GE, ED]
    src = eap_ref[:, ED:ED + 1].astype(jnp.int32)              # [GE, 1] block-global ids
    tgt = tgt_ref[...]                                         # [1, GE] block-global ids

    # ---- packed params: static slices of a single resident VMEM buffer ----
    w1     = p_ref[_R_W1:_R_W1 + ED, 0:H]                      # [ED, H]
    b1     = p_ref[_R_B1:_R_B1 + 1, 0:H]                       # [1, H]
    w2     = p_ref[_R_W2:_R_W2 + H, 0:C * C]                   # [H, C*C]
    b2     = p_ref[_R_B2:_R_B2 + 1, 0:C * C]                   # [1, C*C]
    theta  = p_ref[_R_TH:_R_TH + C, 0:C]                       # [C, C]
    root_b = p_ref[_R_RB:_R_RB + 1, 0:C]                       # [1, C]
    gamma  = p_ref[_R_GA:_R_GA + 1, 0:C]                       # [1, C]
    beta   = p_ref[_R_BE:_R_BE + 1, 0:C]                       # [1, C]
    q_mat  = p_ref[_R_Q:_R_Q + C, 0:C * C]                     # [C, C*C] constant
    r_mat  = p_ref[_R_R:_R_R + C * C, 0:C]                     # [C*C, C] constant

    # ---- block-diagonal gather / scatter masks from block-global edge indices ----
    g_src = (src == lax.broadcasted_iota(jnp.int32, (GE, GN), 1)).astype(jnp.float32)
    t_tgt = (tgt == lax.broadcasted_iota(jnp.int32, (GN, GE), 0)).astype(jnp.float32)

    # ---- edge MLP: per-edge dynamic weights [GE, C*C] ----
    h1 = jnp.maximum(jnp.dot(ea, w1, preferred_element_type=jnp.float32) + b1, 0.0)
    w_e = jnp.dot(h1, w2, preferred_element_type=jnp.float32) + b2

    # ---- gather source node features on the MXU: [GE, C] ----
    x_src = jnp.dot(g_src, x, preferred_element_type=jnp.float32)

    # ---- per-edge message on the MXU: m = ((x_src @ Q) * W_e) @ R ----
    m = jnp.dot(
        jnp.dot(x_src, q_mat, preferred_element_type=jnp.float32) * w_e,
        r_mat, preferred_element_type=jnp.float32)             # [GE, C]

    # ---- mean aggregation: unscaled 0/1 scatter, 1/deg applied on [GN, 1] ----
    aggr = jnp.dot(t_tgt, m, preferred_element_type=jnp.float32)          # [GN, C]
    deg = jnp.dot(t_tgt, jnp.ones((GE, 1), jnp.float32),
                  preferred_element_type=jnp.float32)                     # [GN, 1]
    aggr = aggr * (1.0 / jnp.maximum(deg, 1.0))                # exact divide, tiny tile

    # ---- root transform + bias ----
    h = aggr + jnp.dot(x, theta, preferred_element_type=jnp.float32) + root_b

    # ---- per-graph BatchNorm (training-mode stats over each graph's N nodes,
    #      matching the single-graph module / vmapped reference) + ReLU + residual ----
    log2n = N.bit_length() - 1
    gi = lax.broadcasted_iota(jnp.int32, (GN, GN), 0) >> log2n
    gj = lax.broadcasted_iota(jnp.int32, (GN, GN), 1) >> log2n
    p_avg = (gi == gj).astype(jnp.float32) * (1.0 / N)         # block-diag averaging
    mean_b = jnp.dot(p_avg, h, preferred_element_type=jnp.float32)
    d = h - mean_b
    var_b = jnp.dot(p_avg, d * d, preferred_element_type=jnp.float32)
    hn = d * lax.rsqrt(var_b + EPS) * gamma + beta

    out_ref[...] = x + jnp.maximum(hn, 0.0)


def pack_params(params):
    """One-time packing of all small parameters + the constant Q/R matrices of the
    message factorization into a single padded VMEM buffer."""
    p = jnp.zeros((PR, PC), jnp.float32)
    p = p.at[_R_W1:_R_W1 + ED, 0:H].set(params["w1"])
    p = p.at[_R_B1:_R_B1 + 1, 0:H].set(params["b1"])
    p = p.at[_R_W2:_R_W2 + H, 0:C * C].set(params["w2"])
    p = p.at[_R_B2:_R_B2 + 1, 0:C * C].set(params["b2"])
    p = p.at[_R_TH:_R_TH + C, 0:C].set(params["theta"])
    p = p.at[_R_RB:_R_RB + 1, 0:C].set(params["root_b"])
    p = p.at[_R_GA:_R_GA + 1, 0:C].set(params["gamma"])
    p = p.at[_R_BE:_R_BE + 1, 0:C].set(params["beta"])
    # Q[c, j] = 1 iff j // C == c (replicate input channels); R[j, o] = 1 iff j % C == o
    j = jnp.arange(C * C)
    c = jnp.arange(C)
    p = p.at[_R_Q:_R_Q + C, 0:C * C].set((j[None, :] // C == c[:, None]).astype(jnp.float32))
    p = p.at[_R_R:_R_R + C * C, 0:C].set((j[:, None] % C == c[None, :]).astype(jnp.float32))
    return p


def res_graph_conv_lyr(x, edge_index, edge_attr, packed_params,
                       graphs_per_block=GRAPHS_PER_BLOCK):
    """x: [B,N,C] f32, edge_index: [B,2,E] int, edge_attr: [B,E,ED] f32,
    packed_params: [PR,PC] f32 (from pack_params)."""
    Bb = x.shape[0]
    GB = graphs_per_block
    assert Bb % GB == 0
    NB = Bb // GB                       # grid steps
    GN, GE = GB * N, GB * E

    # --- layout plumbing (tiny XLA int ops), not compute hoisting ---
    # block-global node ids: graph g of a block owns nodes [g*N, (g+1)*N)
    offs = ((jnp.arange(Bb, dtype=jnp.int32) % GB) * N)[:, None]      # [B, 1]
    src_g = edge_index[:, 0, :].astype(jnp.int32) + offs              # [B, E]
    tgt_g = edge_index[:, 1, :].astype(jnp.int32) + offs              # [B, E]
    # src ids ride as one extra f32 lane of the edge-attr slab (exact for ids < 2^24)
    eap = jnp.concatenate([edge_attr, src_g[..., None].astype(jnp.float32)], axis=-1)
    eap_stk = eap.reshape(NB, GE, ED + 1)                             # [NB, GB*E, ED+1]
    tgt_row = tgt_g.reshape(NB, 1, GE)                                # [NB, 1, GB*E]
    x_stk = x.reshape(NB, GN, C)                                      # [NB, GB*N, C]

    grid_spec = pltpu.PrefetchScalarGridSpec(
        num_scalar_prefetch=0,
        grid=(NB,),
        in_specs=[
            pl.BlockSpec((None, 1, GE), lambda b: (b, 0, 0)),         # tgt ids (row)
            pl.BlockSpec((None, GN, C), lambda b: (b, 0, 0)),         # stacked node feats
            pl.BlockSpec((None, GE, ED + 1), lambda b: (b, 0, 0)),    # edge attrs + src ids
            pl.BlockSpec((PR, PC), lambda b: (0, 0)),                 # packed params
        ],
        out_specs=pl.BlockSpec((None, GN, C), lambda b: (b, 0, 0)),
    )
    out = pl.pallas_call(
        res_graph_conv_kernel,
        out_shape=jax.ShapeDtypeStruct((NB, GN, C), jnp.float32),
        grid_spec=grid_spec,
        compiler_params=pltpu.CompilerParams(
            dimension_semantics=("parallel",)),                       # both TCs on v7x
    )(tgt_row, x_stk, eap_stk, packed_params)
    return out.reshape(Bb, N, C)


def make_params(key):
    ks = jax.random.split(key, 6)
    scale = 0.1
    return {
        "w1": scale * jax.random.normal(ks[0], (ED, H), jnp.float32),
        "b1": jnp.zeros((1, H), jnp.float32),
        "w2": scale * jax.random.normal(ks[1], (H, C * C), jnp.float32),
        "b2": jnp.zeros((1, C * C), jnp.float32),
        "theta": scale * jax.random.normal(ks[2], (C, C), jnp.float32),
        "root_b": jnp.zeros((1, C), jnp.float32),
        "gamma": jnp.ones((1, C), jnp.float32),
        "beta": jnp.zeros((1, C), jnp.float32),
    }


def _reference_single(x, edge_index, edge_attr, params):
    """Pure-JAX reference, one graph."""
    src, tgt = edge_index[0], edge_index[1]
    h1 = jnp.maximum(edge_attr @ params["w1"] + params["b1"], 0.0)
    w_e = (h1 @ params["w2"] + params["b2"]).reshape(E, C, C)
    m = jnp.einsum("ec,eco->eo", x[src], w_e)
    aggr = jnp.zeros((N, C)).at[tgt].add(m)
    deg = jnp.maximum(jnp.zeros((N,)).at[tgt].add(1.0), 1.0)
    aggr = aggr / deg[:, None]
    h = aggr + x @ params["theta"] + params["root_b"]
    mean = h.mean(axis=0, keepdims=True)
    var = ((h - mean) ** 2).mean(axis=0, keepdims=True)
    h = (h - mean) * lax.rsqrt(var + EPS) * params["gamma"] + params["beta"]
    return x + jnp.maximum(h, 0.0)


reference = jax.vmap(_reference_single, in_axes=(0, 0, 0, None))


if __name__ == "__main__":
    key = jax.random.PRNGKey(0)
    kx, ke, ka, kp = jax.random.split(key, 4)

    x = jax.random.normal(kx, (B, N, C), jnp.float32)
    edge_index = jax.random.randint(ke, (B, 2, E), 0, N, dtype=jnp.int32)
    edge_attr = jax.random.normal(ka, (B, E, ED), jnp.float32)
    params = make_params(kp)
    packed = pack_params(params)          # one-time prep, off the per-call hot path

    fwd = jax.jit(res_graph_conv_lyr)
    out = jax.block_until_ready(fwd(x, edge_index, edge_attr, packed))

    ref = reference(x, edge_index, edge_attr, params)
    assert out.shape == (B, N, C)
    assert jnp.allclose(out, ref, atol=1e-4, rtol=1e-4), "mismatch vs reference"

    print("KERNEL_OK")
</pallas_src>

<mosaic_0001>
module attributes {stable_mosaic.version = 11 : i64} {
  func.func @res_graph_conv_kernel(%arg0: i32, %arg1: memref<1x1x96xi32, #tpu.memory_space<vmem>>, %arg2: memref<1x32x8xf32, #tpu.memory_space<vmem>>, %arg3: memref<1x96x5xf32, #tpu.memory_space<vmem>>, %arg4: memref<128x64xf32, #tpu.memory_space<vmem>>, %arg5: memref<1x32x8xf32, #tpu.memory_space<vmem>>) attributes {dimension_semantics = [#tpu.dimension_semantics<parallel>], iteration_bounds = array<i64: 2>, scalar_prefetch = 0 : i64, scratch_operands = 0 : i64, tpu.core_type = #tpu.core_type<tc>, window_params = [{transform_indices = @transform_0, window_bounds = array<i64: 1, 1, 96>}, {transform_indices = @transform_1, window_bounds = array<i64: 1, 32, 8>}, {transform_indices = @transform_2, window_bounds = array<i64: 1, 96, 5>}, {pipeline_mode = #tpu.pipeline_mode<synchronous>, transform_indices = @transform_3, window_bounds = array<i64: 128, 64>}, {transform_indices = @transform_4, window_bounds = array<i64: 1, 32, 8>}]} {
    %c0 = arith.constant 0 : index
    %c0_0 = arith.constant 0 : index
    %c0_1 = arith.constant 0 : index
    %0 = vector.load %arg2[%c0, %c0_0, %c0_1] : memref<1x32x8xf32, #tpu.memory_space<vmem>>, vector<1x32x8xf32>
    %1 = vector.shape_cast %0 : vector<1x32x8xf32> to vector<32x8xf32>
    %c0_2 = arith.constant 0 : index
    %c0_3 = arith.constant 0 : index
    %c0_4 = arith.constant 0 : index
    %2 = vector.load %arg3[%c0_2, %c0_3, %c0_4] : memref<1x96x5xf32, #tpu.memory_space<vmem>>, vector<1x96x4xf32>
    %3 = vector.shape_cast %2 : vector<1x96x4xf32> to vector<96x4xf32>
    %c0_5 = arith.constant 0 : index
    %c0_6 = arith.constant 0 : index
    %c4 = arith.constant 4 : index
    %4 = vector.load %arg3[%c0_5, %c0_6, %c4] : memref<1x96x5xf32, #tpu.memory_space<vmem>>, vector<1x96x1xf32>
    %5 = vector.shape_cast %4 : vector<1x96x1xf32> to vector<96x1xf32>
    %6 = arith.fptosi %5 : vector<96x1xf32> to vector<96x1xi32>
    %c0_7 = arith.constant 0 : index
    %c0_8 = arith.constant 0 : index
    %c0_9 = arith.constant 0 : index
    %7 = vector.load %arg1[%c0_7, %c0_8, %c0_9] : memref<1x1x96xi32, #tpu.memory_space<vmem>>, vector<1x1x96xi32>
    %8 = vector.shape_cast %7 : vector<1x1x96xi32> to vector<1x96xi32>
    %c0_10 = arith.constant 0 : index
    %c0_11 = arith.constant 0 : index
    %9 = vector.load %arg4[%c0_10, %c0_11] : memref<128x64xf32, #tpu.memory_space<vmem>>, vector<4x16xf32>
    %c8 = arith.constant 8 : index
    %c0_12 = arith.constant 0 : index
    %10 = vector.load %arg4[%c8, %c0_12] : memref<128x64xf32, #tpu.memory_space<vmem>>, vector<1x16xf32>
    %c16 = arith.constant 16 : index
    %c0_13 = arith.constant 0 : index
    %11 = vector.load %arg4[%c16, %c0_13] : memref<128x64xf32, #tpu.memory_space<vmem>>, vector<16x64xf32>
    %c32 = arith.constant 32 : index
    %c0_14 = arith.constant 0 : index
    %12 = vector.load %arg4[%c32, %c0_14] : memref<128x64xf32, #tpu.memory_space<vmem>>, vector<1x64xf32>
    %c40 = arith.constant 40 : index
    %c0_15 = arith.constant 0 : index
    %13 = vector.load %arg4[%c40, %c0_15] : memref<128x64xf32, #tpu.memory_space<vmem>>, vector<8x8xf32>
    %c48 = arith.constant 48 : index
    %c0_16 = arith.constant 0 : index
    %14 = vector.load %arg4[%c48, %c0_16] : memref<128x64xf32, #tpu.memory_space<vmem>>, vector<1x8xf32>
    %c49 = arith.constant 49 : index
    %c0_17 = arith.constant 0 : index
    %15 = vector.load %arg4[%c49, %c0_17] : memref<128x64xf32, #tpu.memory_space<vmem>>, vector<1x8xf32>
    %c50 = arith.constant 50 : index
    %c0_18 = arith.constant 0 : index
    %16 = vector.load %arg4[%c50, %c0_18] : memref<128x64xf32, #tpu.memory_space<vmem>>, vector<1x8xf32>
    %c56 = arith.constant 56 : index
    %c0_19 = arith.constant 0 : index
    %17 = vector.load %arg4[%c56, %c0_19] : memref<128x64xf32, #tpu.memory_space<vmem>>, vector<8x64xf32>
    %c64 = arith.constant 64 : index
    %c0_20 = arith.constant 0 : index
    %18 = vector.load %arg4[%c64, %c0_20] : memref<128x64xf32, #tpu.memory_space<vmem>>, vector<64x8xf32>
    %19 = tpu.iota {dimensions = array<i32: 1>} : vector<96x32xi32>
    %20 = vector.broadcast %6 : vector<96x1xi32> to vector<96x32xi32>
    %21 = arith.cmpi eq, %20, %19 : vector<96x32xi32>
    %22 = arith.extui %21 : vector<96x32xi1> to vector<96x32xi32>
    %23 = arith.sitofp %22 : vector<96x32xi32> to vector<96x32xf32>
    %24 = tpu.iota {dimensions = array<i32: 0>} : vector<32x96xi32>
    %25 = vector.broadcast %8 : vector<1x96xi32> to vector<32x96xi32>
    %26 = arith.cmpi eq, %25, %24 : vector<32x96xi32>
    %27 = arith.extui %26 : vector<32x96xi1> to vector<32x96xi32>
    %28 = arith.sitofp %27 : vector<32x96xi32> to vector<32x96xf32>
    %cst = arith.constant dense<0.000000e+00> : vector<96x16xf32>
    %29 = tpu.matmul %3, %9, %cst {dimension_numbers = #tpu.dot_dimension_numbers<[1], [0], [0], [1], [0, 0, 1, 1], [], []>} : vector<96x4xf32>, vector<4x16xf32>, vector<96x16xf32> -> vector<96x16xf32>
    %30 = vector.broadcast %10 : vector<1x16xf32> to vector<96x16xf32>
    %31 = arith.addf %29, %30 : vector<96x16xf32>
    %cst_21 = arith.constant 0.000000e+00 : f32
    %32 = vector.broadcast %cst_21 : f32 to vector<96x16xf32>
    %33 = arith.maximumf %31, %32 : vector<96x16xf32>
    %cst_22 = arith.constant dense<0.000000e+00> : vector<96x64xf32>
    %34 = tpu.matmul %33, %11, %cst_22 {dimension_numbers = #tpu.dot_dimension_numbers<[1], [0], [0], [1], [0, 0, 1, 1], [], []>} : vector<96x16xf32>, vector<16x64xf32>, vector<96x64xf32> -> vector<96x64xf32>
    %35 = vector.broadcast %12 : vector<1x64xf32> to vector<96x64xf32>
    %36 = arith.addf %34, %35 : vector<96x64xf32>
    %cst_23 = arith.constant dense<0.000000e+00> : vector<96x8xf32>
    %37 = tpu.matmul %23, %1, %cst_23 {dimension_numbers = #tpu.dot_dimension_numbers<[1], [0], [0], [1], [0, 0, 1, 1], [], []>} : vector<96x32xf32>, vector<32x8xf32>, vector<96x8xf32> -> vector<96x8xf32>
    %cst_24 = arith.constant dense<0.000000e+00> : vector<96x64xf32>
    %38 = tpu.matmul %37, %17, %cst_24 {dimension_numbers = #tpu.dot_dimension_numbers<[1], [0], [0], [1], [0, 0, 1, 1], [], []>} : vector<96x8xf32>, vector<8x64xf32>, vector<96x64xf32> -> vector<96x64xf32>
    %39 = arith.mulf %38, %36 : vector<96x64xf32>
    %cst_25 = arith.constant dense<0.000000e+00> : vector<96x8xf32>
    %40 = tpu.matmul %39, %18, %cst_25 {dimension_numbers = #tpu.dot_dimension_numbers<[1], [0], [0], [1], [0, 0, 1, 1], [], []>} : vector<96x64xf32>, vector<64x8xf32>, vector<96x8xf32> -> vector<96x8xf32>
    %cst_26 = arith.constant dense<0.000000e+00> : vector<32x8xf32>
    %41 = tpu.matmul %28, %40, %cst_26 {dimension_numbers = #tpu.dot_dimension_numbers<[1], [0], [0], [1], [0, 0, 1, 1], [], []>} : vector<32x96xf32>, vector<96x8xf32>, vector<32x8xf32> -> vector<32x8xf32>
    %cst_27 = arith.constant 1.000000e+00 : f32
    %42 = vector.broadcast %cst_27 : f32 to vector<96x1xf32>
    %cst_28 = arith.constant dense<0.000000e+00> : vector<32x1xf32>
    %43 = tpu.matmul %28, %42, %cst_28 {dimension_numbers = #tpu.dot_dimension_numbers<[1], [0], [0], [1], [0, 0, 1, 1], [], []>} : vector<32x96xf32>, vector<96x1xf32>, vector<32x1xf32> -> vector<32x1xf32>
    %cst_29 = arith.constant 1.000000e+00 : f32
    %44 = vector.broadcast %cst_29 : f32 to vector<32x1xf32>
    %45 = arith.maximumf %43, %44 : vector<32x1xf32>
    %cst_30 = arith.constant 1.000000e+00 : f32
    %46 = vector.broadcast %cst_30 : f32 to vector<32x1xf32>
    %47 = arith.divf %46, %45 : vector<32x1xf32>
    %48 = vector.broadcast %47 : vector<32x1xf32> to vector<32x8xf32>
    %49 = arith.mulf %41, %48 : vector<32x8xf32>
    %cst_31 = arith.constant dense<0.000000e+00> : vector<32x8xf32>
    %50 = tpu.matmul %1, %13, %cst_31 {dimension_numbers = #tpu.dot_dimension_numbers<[1], [0], [0], [1], [0, 0, 1, 1], [], []>} : vector<32x8xf32>, vector<8x8xf32>, vector<32x8xf32> -> vector<32x8xf32>
    %51 = arith.addf %49, %50 : vector<32x8xf32>
    %52 = vector.broadcast %14 : vector<1x8xf32> to vector<32x8xf32>
    %53 = arith.addf %51, %52 : vector<32x8xf32>
    %54 = tpu.iota {dimensions = array<i32: 0>} : vector<32x32xi32>
    %c4_i32 = arith.constant 4 : i32
    %55 = vector.broadcast %c4_i32 : i32 to vector<32x32xi32>
    %56 = arith.shrsi %54, %55 : vector<32x32xi32>
    %57 = tpu.iota {dimensions = array<i32: 1>} : vector<32x32xi32>
    %c4_i32_32 = arith.constant 4 : i32
    %58 = vector.broadcast %c4_i32_32 : i32 to vector<32x32xi32>
    %59 = arith.shrsi %57, %58 : vector<32x32xi32>
    %60 = arith.cmpi eq, %56, %59 : vector<32x32xi32>
    %61 = arith.extui %60 : vector<32x32xi1> to vector<32x32xi32>
    %62 = arith.sitofp %61 : vector<32x32xi32> to vector<32x32xf32>
    %cst_33 = arith.constant 6.250000e-02 : f32
    %63 = vector.broadcast %cst_33 : f32 to vector<32x32xf32>
    %64 = arith.mulf %62, %63 : vector<32x32xf32>
    %cst_34 = arith.constant dense<0.000000e+00> : vector<32x8xf32>
    %65 = tpu.matmul %64, %53, %cst_34 {dimension_numbers = #tpu.dot_dimension_numbers<[1], [0], [0], [1], [0, 0, 1, 1], [], []>} : vector<32x32xf32>, vector<32x8xf32>, vector<32x8xf32> -> vector<32x8xf32>
    %66 = arith.subf %53, %65 : vector<32x8xf32>
    %67 = arith.mulf %66, %66 : vector<32x8xf32>
    %cst_35 = arith.constant dense<0.000000e+00> : vector<32x8xf32>
    %68 = tpu.matmul %64, %67, %cst_35 {dimension_numbers = #tpu.dot_dimension_numbers<[1], [0], [0], [1], [0, 0, 1, 1], [], []>} : vector<32x32xf32>, vector<32x8xf32>, vector<32x8xf32> -> vector<32x8xf32>
    %cst_36 = arith.constant 9.99999974E-6 : f32
    %69 = vector.broadcast %cst_36 : f32 to vector<32x8xf32>
    %70 = arith.addf %68, %69 : vector<32x8xf32>
    %71 = math.rsqrt %70 : vector<32x8xf32>
    %72 = arith.mulf %66, %71 : vector<32x8xf32>
    %73 = vector.broadcast %15 : vector<1x8xf32> to vector<32x8xf32>
    %74 = arith.mulf %72, %73 : vector<32x8xf32>
    %75 = vector.broadcast %16 : vector<1x8xf32> to vector<32x8xf32>
    %76 = arith.addf %74, %75 : vector<32x8xf32>
    %cst_37 = arith.constant 0.000000e+00 : f32
    %77 = vector.broadcast %cst_37 : f32 to vector<32x8xf32>
    %78 = arith.maximumf %76, %77 : vector<32x8xf32>
    %79 = arith.addf %1, %78 : vector<32x8xf32>
    %c0_38 = arith.constant 0 : index
    %c0_39 = arith.constant 0 : index
    %c0_40 = arith.constant 0 : index
    %80 = vector.load %arg5[%c0_38, %c0_39, %c0_40] : memref<1x32x8xf32, #tpu.memory_space<vmem>>, vector<1x32x8xf32>
    %81 = vector.shape_cast %80 : vector<1x32x8xf32> to vector<32x8xf32>
    %82 = vector.shape_cast %79 : vector<32x8xf32> to vector<1x32x8xf32>
    tpu.vector_store %arg5[%c0_38, %c0_39, %c0_40], %82 {strides = array<i32>} : memref<1x32x8xf32, #tpu.memory_space<vmem>>, vector<1x32x8xf32>,
    return
  }
  func.func @transform_0(%arg0: i32) -> (i32, i32, i32) {
    %c0_i32 = arith.constant 0 : i32
    %c0_i32_0 = arith.constant 0 : i32
    %c0_i32_1 = arith.constant 0 : i32
    return %arg0, %c0_i32, %c0_i32_0 : i32, i32, i32
  }
  func.func @transform_1(%arg0: i32) -> (i32, i32, i32) {
    %c0_i32 = arith.constant 0 : i32
    %c0_i32_0 = arith.constant 0 : i32
    %c0_i32_1 = arith.constant 0 : i32
    return %arg0, %c0_i32, %c0_i32_0 : i32, i32, i32
  }
  func.func @transform_2(%arg0: i32) -> (i32, i32, i32) {
    %c0_i32 = arith.constant 0 : i32
    %c0_i32_0 = arith.constant 0 : i32
    %c0_i32_1 = arith.constant 0 : i32
    return %arg0, %c0_i32, %c0_i32_0 : i32, i32, i32
  }
  func.func @transform_3(%arg0: i32) -> (i32, i32) {
    %c0_i32 = arith.constant 0 : i32
    %c0_i32_0 = arith.constant 0 : i32
    %c0_i32_1 = arith.constant 0 : i32
    return %c0_i32, %c0_i32_0 : i32, i32
  }
  func.func @transform_4(%arg0: i32) -> (i32, i32, i32) {
    %c0_i32 = arith.constant 0 : i32
    %c0_i32_0 = arith.constant 0 : i32
    %c0_i32_1 = arith.constant 0 : i32
    return %arg0, %c0_i32, %c0_i32_0 : i32, i32, i32
  }
}

</mosaic_0001>

<llo_original>
// kernel: res_graph_conv_lyr.1
$region0: #{res_graph_conv_lyr.1}
  #allocation0 [shape = 'u32[]', space=smem, size = 0x4, offset = 0x4, fixed_abs, tag = 'smem constant byte address 0x4 - core index']
  #allocation1 [shape = 'u32[144,128]{1,0:T(1,128)}', space=vmem, size = 0x12000, scoped, tag = 'internal scratch']
  %s0 = inlined_call_operand.vmem [shape: s32[2,1,96], index: 0, kind: input, shape index: {}]
  %s1 = inlined_call_operand.vmem [shape: f32[2,32,8], index: 1, kind: input, shape index: {}]
  %s2 = inlined_call_operand.vmem [shape: f32[2,96,5], index: 2, kind: input, shape index: {}]
  %s3 = inlined_call_operand.vmem [shape: f32[128,64], index: 3, kind: input, shape index: {}]
  %s4 = inlined_call_operand.vmem [shape: f32[2,32,8], index: 4, kind: output, shape index: {}]
  %s5 = sld [smem:[#allocation0]]
  $region49: #{res_graph_conv_lyr.1} parent=0
    _
  %s7 = ssub.s32 1, %s5
  %s8 = scalar_select 0, %s7, %s5
  loop: start=0, step=1, limit=4
  $region2: #{res_graph_conv_lyr.1} parent=0 // loop_pre_header
    _
  $region3: #{res_graph_conv_lyr.1} parent=0 // loop_header
    %s10 = sphi 0, %s14
    %p11 = scmp.ge.s32.totalorder %s10, 4
    %s20 = sphi 0, %s22
    %s23 = sphi 0, %s20
    %s24 = sphi 0, %s23
    %s40 = sphi 0, %s24
    %s46 = sphi 0, %s48
    %s49 = sphi 0, %s46
    %s50 = sphi 0, %s49
    %s66 = sphi 0, %s50
    %s72 = sphi 0, %s74
    %s75 = sphi 0, %s72
    %s76 = sphi 0, %s75
    %s92 = sphi 0, %s76
    %s96 = sphi 0, %s96
    %s98 = sphi 0, %s96
    %s99 = sphi 0, %s98
    %s113 = sphi 0, %s99
    %s119 = sphi 0, %s121
    %s122 = sphi 0, %s119
    %s123 = sphi 0, %s122
    %s139 = sphi 0, %s123
  $region4: #{res_graph_conv_lyr.1} parent=0 // loop_header_branch
    %13 = sbr.rel (%p11) target = $region8
  $region5: #{res_graph_conv_lyr.1} parent=0 // loop_body
    %s15 = ssub.s32 %s10, 1
    %s16 = ssub.s32 %s10, 2
    %s17 = sadd.s32 %s10, 1
    %s18 = ssub.s32 %s10, %s17
    %p19 = scmp.eq.s32.totalorder %s18, 0
    %s21 = sadd.s32 %s20, 1
    %s22 = scalar_select %p19, %s20, %s21
    %p25 = pneg %p19
    %p26 = scmp.eq.s32.totalorder %s10, 1
    %p27 = por %p25, %p26
    %p28 = scmp.ne.s32.totalorder %s20, %s23
    %p29 = scmp.eq.s32.totalorder %s10, 0
    %p30 = por %p28, %p29
    %p31 = scmp.ne.s32.totalorder %s20, %s23
    %p32 = scmp.eq.s32.totalorder %s15, 1
    %p33 = por %p31, %p32
    %p34 = scmp.ne.s32.totalorder %s23, %s24
    %p35 = scmp.eq.s32.totalorder %s15, 0
    %p36 = por %p34, %p35
    %p37 = scmp.ne.s32.totalorder %s23, %s24
    %p38 = scmp.eq.s32.totalorder %s16, 1
    %p39 = por %p37, %p38
    %p41 = scmp.ne.s32.totalorder %s24, %s40
    %p42 = scmp.eq.s32.totalorder %s16, 0
    %p43 = por %p41, %p42
    %s44 = ssub.s32 %s10, %s17
    %p45 = scmp.eq.s32.totalorder %s44, 0
    %s47 = sadd.s32 %s46, 1
    %s48 = scalar_select %p45, %s46, %s47
    %p51 = pneg %p45
    %p52 = scmp.eq.s32.totalorder %s10, 1
    %p53 = por %p51, %p52
    %p54 = scmp.ne.s32.totalorder %s46, %s49
    %p55 = scmp.eq.s32.totalorder %s10, 0
    %p56 = por %p54, %p55
    %p57 = scmp.ne.s32.totalorder %s46, %s49
    %p58 = scmp.eq.s32.totalorder %s15, 1
    %p59 = por %p57, %p58
    %p60 = scmp.ne.s32.totalorder %s49, %s50
    %p61 = scmp.eq.s32.totalorder %s15, 0
    %p62 = por %p60, %p61
    %p63 = scmp.ne.s32.totalorder %s49, %s50
    %p64 = scmp.eq.s32.totalorder %s16, 1
    %p65 = por %p63, %p64
    %p67 = scmp.ne.s32.totalorder %s50, %s66
    %p68 = scmp.eq.s32.totalorder %s16, 0
    %p69 = por %p67, %p68
    %s70 = ssub.s32 %s10, %s17
    %p71 = scmp.eq.s32.totalorder %s70, 0
    %s73 = sadd.s32 %s72, 1
    %s74 = scalar_select %p71, %s72, %s73
    %p77 = pneg %p71
    %p78 = scmp.eq.s32.totalorder %s10, 1
    %p79 = por %p77, %p78
    %p80 = scmp.ne.s32.totalorder %s72, %s75
    %p81 = scmp.eq.s32.totalorder %s10, 0
    %p82 = por %p80, %p81
    %p83 = scmp.ne.s32.totalorder %s72, %s75
    %p84 = scmp.eq.s32.totalorder %s15, 1
    %p85 = por %p83, %p84
    %p86 = scmp.ne.s32.totalorder %s75, %s76
    %p87 = scmp.eq.s32.totalorder %s15, 0
    %p88 = por %p86, %p87
    %p89 = scmp.ne.s32.totalorder %s75, %s76
    %p90 = scmp.eq.s32.totalorder %s16, 1
    %p91 = por %p89, %p90
    %p93 = scmp.ne.s32.totalorder %s76, %s92
    %p94 = scmp.eq.s32.totalorder %s16, 0
    %p95 = por %p93, %p94
    %s97 = sadd.s32 %s96, 1
    %p100 = scmp.eq.s32.totalorder %s10, 1
    %p101 = scmp.ne.s32.totalorder %s96, %s98
    %p102 = scmp.eq.s32.totalorder %s10, 0
    %p103 = por %p101, %p102
    %p104 = scmp.ne.s32.totalorder %s96, %s98
    %p105 = scmp.eq.s32.totalorder %s15, 1
    %p106 = por %p104, %p105
    %p107 = scmp.ne.s32.totalorder %s98, %s99
    %p108 = scmp.eq.s32.totalorder %s15, 0
    %p109 = por %p107, %p108
    %p110 = scmp.ne.s32.totalorder %s98, %s99
    %p111 = scmp.eq.s32.totalorder %s16, 1
    %p112 = por %p110, %p111
    %p114 = scmp.ne.s32.totalorder %s99, %s113
    %p115 = scmp.eq.s32.totalorder %s16, 0
    %p116 = por %p114, %p115
    %s117 = ssub.s32 %s10, %s17
    %p118 = scmp.eq.s32.totalorder %s117, 0
    %s120 = sadd.s32 %s119, 1
    %s121 = scalar_select %p118, %s119, %s120
    %p124 = pneg %p118
    %p125 = scmp.eq.s32.totalorder %s10, 1
    %p126 = por %p124, %p125
    %p127 = scmp.ne.s32.totalorder %s119, %s122
    %p128 = scmp.eq.s32.totalorder %s10, 0
    %p129 = por %p127, %p128
    %p130 = scmp.ne.s32.totalorder %s119, %s122
    %p131 = scmp.eq.s32.totalorder %s15, 1
    %p132 = por %p130, %p131
    %p133 = scmp.ne.s32.totalorder %s122, %s123
    %p134 = scmp.eq.s32.totalorder %s15, 0
    %p135 = por %p133, %p134
    %p136 = scmp.ne.s32.totalorder %s122, %s123
    %p137 = scmp.eq.s32.totalorder %s16, 1
    %p138 = por %p136, %p137
    %p140 = scmp.ne.s32.totalorder %s123, %s139
    %p141 = scmp.eq.s32.totalorder %s16, 0
    %p142 = por %p140, %p141
    %p143 = scmp.le.s32.totalorder 1, %s10
    %p144 = scmp.lt.s32.totalorder %s10, 3
    %p145 = pnand %p143, %p144
    %p146 = pneg %p145
    // Predicated region
    $region9: #{res_graph_conv_lyr.1} parent=5 // pred_check
      _
    $region10: #{res_graph_conv_lyr.1} parent=5 // pred_check_branch
      %148 = sbr.rel (%p145) target = $region12
    $region11: #{res_graph_conv_lyr.1} parent=5 // pred_region
      %s149 = ssub.s32 %s10, 1
      // Predicated region
      $region13: #{res_graph_conv_lyr.1} parent=11 // pred_check
        %p150 = pneg %p109
      $region14: #{res_graph_conv_lyr.1} parent=11 // pred_check_branch
        %152 = sbr.rel (%p150) target = $region16
      $region15: #{res_graph_conv_lyr.1} parent=11 // pred_region
        _
      $region16: #{res_graph_conv_lyr.1} parent=11 // pred_fallthru
        _
    $region12: #{res_graph_conv_lyr.1} parent=5 // pred_fallthru
      _
    %p153 = scmp.lt.s32.totalorder %s10, 2
    // Predicated region
    $region17: #{res_graph_conv_lyr.1} parent=5 // pred_check
      %p154 = pneg %p153
    $region18: #{res_graph_conv_lyr.1} parent=5 // pred_check_branch
      %156 = sbr.rel (%p154) target = $region20
    $region19: #{res_graph_conv_lyr.1} parent=5 // pred_region
      // Predicated region
      $region21: #{res_graph_conv_lyr.1} parent=19 // pred_check
        %p157 = pneg %p30
      $region22: #{res_graph_conv_lyr.1} parent=19 // pred_check_branch
        %159 = sbr.rel (%p157) target = $region24
      $region23: #{res_graph_conv_lyr.1} parent=19 // pred_region
        %p160 = scmp.lt.s32.totalorder %s10, 1
        %s161 = scalar_select %p160, %s10, 1
        %s162 = scalar_lea.vmem %s0, %s161
      $region24: #{res_graph_conv_lyr.1} parent=19 // pred_fallthru
        _
      // Predicated region
      $region25: #{res_graph_conv_lyr.1} parent=19 // pred_check
        %p163 = pneg %p56
      $region26: #{res_graph_conv_lyr.1} parent=19 // pred_check_branch
        %165 = sbr.rel (%p163) target = $region28
      $region27: #{res_graph_conv_lyr.1} parent=19 // pred_region
        %p166 = scmp.lt.s32.totalorder %s10, 1
        %s167 = scalar_select %p166, %s10, 1
        %s168 = smul.addr %s167, 4
        %s169 = smul.addr %s168, 8
        %s170 = scalar_lea.vmem %s1, %s169
      $region28: #{res_graph_conv_lyr.1} parent=19 // pred_fallthru
        _
      // Predicated region
      $region29: #{res_graph_conv_lyr.1} parent=19 // pred_check
        %p171 = pneg %p82
      $region30: #{res_graph_conv_lyr.1} parent=19 // pred_check_branch
        %173 = sbr.rel (%p171) target = $region32
      $region31: #{res_graph_conv_lyr.1} parent=19 // pred_region
        %p174 = scmp.lt.s32.totalorder %s10, 1
        %s175 = scalar_select %p174, %s10, 1
        %s176 = smul.addr %s175, 12
        %s177 = smul.addr %s176, 8
        %s178 = scalar_lea.vmem %s2, %s177
      $region32: #{res_graph_conv_lyr.1} parent=19 // pred_fallthru
        _
    $region20: #{res_graph_conv_lyr.1} parent=5 // pred_fallthru
      _
    %p179 = scmp.le.s32.totalorder 1, %s10
    %p180 = scmp.lt.s32.totalorder %s10, 3
    %p181 = pnand %p179, %p180
    %p182 = pneg %p181
    // Predicated region
    $region33: #{res_graph_conv_lyr.1} parent=5 // pred_check
      _
    $region34: #{res_graph_conv_lyr.1} parent=5 // pred_check_branch
      %184 = sbr.rel (%p181) target = $region36
    $region35: #{res_graph_conv_lyr.1} parent=5 // pred_region
      %s185 = ssub.s32 %s10, 1
      %p186 = scmp.lt.s32.totalorder %s15, 1
      %s187 = scalar_select %p186, %s15, 1
      %s188 = scalar_lea.vmem %s0, %s187
      %p189 = pneg %p36
      %p190 = pneg %p33
      %p191 = scmp.lt.s32.totalorder %s15, 1
      %s192 = scalar_select %p191, %s15, 1
      %s193 = smul.addr %s192, 4
      %s194 = smul.addr %s193, 8
      %s195 = scalar_lea.vmem %s1, %s194
      %p196 = pneg %p62
      %p197 = pneg %p59
      %p198 = scmp.lt.s32.totalorder %s15, 1
      %s199 = scalar_select %p198, %s15, 1
      %s200 = smul.addr %s199, 12
      %s201 = smul.addr %s200, 8
      %s202 = scalar_lea.vmem %s2, %s201
      %p203 = pneg %p88
      %p204 = pneg %p85
      %p205 = pneg %p109
      %p206 = pneg %p106
      %p207 = pneg %p135
      %p208 = pneg %p132
      %p209 = scmp.lt.s32.totalorder %s15, 1
      %s210 = scalar_select %p209, %s15, 1
      %s211 = smul.addr %s210, 4
      %s212 = smul.addr %s211, 8
      %s213 = scalar_lea.vmem %s4, %s212
      %p214 = scmp.lt.s32.totalorder %s15, 1
      %s215 = scalar_select %p214, %s15, 1
      %s216 = scalar_lea.vmem %s0, %s215
      %p217 = scmp.lt.s32.totalorder %s15, 1
      %s218 = scalar_select %p217, %s15, 1
      %s219 = smul.addr %s218, 4
      %s220 = smul.addr %s219, 8
      %s221 = scalar_lea.vmem %s1, %s220
      %p222 = scmp.lt.s32.totalorder %s15, 1
      %s223 = scalar_select %p222, %s15, 1
      %s224 = smul.addr %s223, 12
      %s225 = smul.addr %s224, 8
      %s226 = scalar_lea.vmem %s2, %s225
      %p227 = scmp.lt.s32.totalorder %s15, 1
      %s228 = scalar_select %p227, %s15, 1
      %s229 = smul.addr %s228, 4
      %s230 = smul.addr %s229, 8
      %s231 = scalar_lea.vmem %s4, %s230
      %v232 = vld [vmem:[%s221] sm:$0xff]
      %v233 = vld [vmem:[%s221 + $0x8] sm:$0xff]
      %v234 = vld [vmem:[%s221 + $0x10] sm:$0xff]
      %v235 = vld [vmem:[%s221 + $0x18] sm:$0xff]
      %v236 = vld [vmem:[%s226] sm:$0xff]
      %v237 = vld [vmem:[%s226 + $0x8] sm:$0xff]
      %v238 = vld [vmem:[%s226 + $0x10] sm:$0xff]
      %v239 = vld [vmem:[%s226 + $0x18] sm:$0xff]
      %v240 = vld [vmem:[%s226 + $0x20] sm:$0xff]
      %v241 = vld [vmem:[%s226 + $0x28] sm:$0xff]
      %v242 = vld [vmem:[%s226 + $0x30] sm:$0xff]
      %v243 = vld [vmem:[%s226 + $0x38] sm:$0xff]
      %v244 = vld [vmem:[%s226 + $0x40] sm:$0xff]
      %v245 = vld [vmem:[%s226 + $0x48] sm:$0xff]
      %v246 = vld [vmem:[%s226 + $0x50] sm:$0xff]
      %v247 = vld [vmem:[%s226 + $0x58] sm:$0xff]
      %v248 = vcvt.f32.s32.to.zero.pseudo %v236
      %v249 = vcvt.f32.s32.to.zero.pseudo %v237
      %v250 = vcvt.f32.s32.to.zero.pseudo %v238
      %v251 = vcvt.f32.s32.to.zero.pseudo %v239
      %v252 = vcvt.f32.s32.to.zero.pseudo %v240
      %v253 = vcvt.f32.s32.to.zero.pseudo %v241
      %v254 = vcvt.f32.s32.to.zero.pseudo %v242
      %v255 = vcvt.f32.s32.to.zero.pseudo %v243
      %v256 = vcvt.f32.s32.to.zero.pseudo %v244
      %v257 = vcvt.f32.s32.to.zero.pseudo %v245
      %v258 = vcvt.f32.s32.to.zero.pseudo %v246
      %v259 = vcvt.f32.s32.to.zero.pseudo %v247
      %v260 = vld [vmem:[%s216] sm:$0x1]
      %v261 = vld [vmem:[%s3] sm:$0xf]
      %v262 = vld [vmem:[%s3 + $0x8] sm:$0x1]
      %v263 = vld [vmem:[%s3 + $0x10] sm:$0xff]
      %v264 = vld [vmem:[%s3 + $0x18] sm:$0xff]
      %v265 = vld [vmem:[%s3 + $0x20] sm:$0x1]
      %v266 = vld [vmem:[%s3 + $0x28] sm:$0xff]
      %v267 = vld [vmem:[%s3 + $0x30] sm:$0x1]
      %v268 = vld [vmem:[%s3 + $0x31] sm:$0x1]
      %v269 = vld [vmem:[%s3 + $0x32] sm:$0x1]
      %v270 = vld [vmem:[%s3 + $0x38] sm:$0xff]
      %v271 = vld [vmem:[%s3 + $0x40] sm:$0xff]
      %v272 = vld [vmem:[%s3 + $0x48] sm:$0xff]
      %v273 = vld [vmem:[%s3 + $0x50] sm:$0xff]
      %v274 = vld [vmem:[%s3 + $0x58] sm:$0xff]
      %v275 = vld [vmem:[%s3 + $0x60] sm:$0xff]
      %v276 = vld [vmem:[%s3 + $0x68] sm:$0xff]
      %v277 = vld [vmem:[%s3 + $0x70] sm:$0xff]
      %v278 = vld [vmem:[%s3 + $0x78] sm:$0xff]
      %v279 = vlaneseq
      %v280 = vand.u32 %v279, 127
      %281 = vset.pattern.permute.xlu0 4
      %282 = vperm.xlu0 %281, %v248
      %v283 = vpop.permute.xlu0 %282
      %284 = vset.pattern.permute.xlu0 4
      %285 = vperm.xlu0 %284, %v249
      %v286 = vpop.permute.xlu0 %285
      %287 = vset.pattern.permute.xlu0 4
      %288 = vperm.xlu0 %287, %v250
      %v289 = vpop.permute.xlu0 %288
      %290 = vset.pattern.permute.xlu0 4
      %291 = vperm.xlu0 %290, %v251
      %v292 = vpop.permute.xlu0 %291
      %293 = vset.pattern.permute.xlu0 4
      %294 = vperm.xlu0 %293, %v252
      %v295 = vpop.permute.xlu0 %294
      %296 = vset.pattern.permute.xlu0 4
      %297 = vperm.xlu0 %296, %v253
      %v298 = vpop.permute.xlu0 %297
      %299 = vset.pattern.permute.xlu0 4
      %300 = vperm.xlu0 %299, %v254
      %v301 = vpop.permute.xlu0 %300
      %302 = vset.pattern.permute.xlu0 4
      %303 = vperm.xlu0 %302, %v255
      %v304 = vpop.permute.xlu0 %303
      %305 = vset.pattern.permute.xlu0 4
      %306 = vperm.xlu0 %305, %v256
      %v307 = vpop.permute.xlu0 %306
      %308 = vset.pattern.permute.xlu0 4
      %309 = vperm.xlu0 %308, %v257
      %v310 = vpop.permute.xlu0 %309
      %311 = vset.pattern.permute.xlu0 4
      %312 = vperm.xlu0 %311, %v258
      %v313 = vpop.permute.xlu0 %312
      %314 = vset.pattern.permute.xlu0 4
      %315 = vperm.xlu0 %314, %v259
      %v316 = vpop.permute.xlu0 %315
      %vm317 = vcmp.eq.s32.totalorder %v283, %v280
      %vm318 = vcmp.eq.s32.totalorder %v286, %v280
      %vm319 = vcmp.eq.s32.totalorder %v289, %v280
      %vm320 = vcmp.eq.s32.totalorder %v292, %v280
      %vm321 = vcmp.eq.s32.totalorder %v295, %v280
      %vm322 = vcmp.eq.s32.totalorder %v298, %v280
      %vm323 = vcmp.eq.s32.totalorder %v301, %v280
      %vm324 = vcmp.eq.s32.totalorder %v304, %v280
      %vm325 = vcmp.eq.s32.totalorder %v307, %v280
      %vm326 = vcmp.eq.s32.totalorder %v310, %v280
      %vm327 = vcmp.eq.s32.totalorder %v313, %v280
      %vm328 = vcmp.eq.s32.totalorder %v316, %v280
      %v329 = vsel %vm317, 1, 0
      %v330 = vsel %vm318, 1, 0
      %v331 = vsel %vm319, 1, 0
      %v332 = vsel %vm320, 1, 0
      %v333 = vsel %vm321, 1, 0
      %v334 = vsel %vm322, 1, 0
      %v335 = vsel %vm323, 1, 0
      %v336 = vsel %vm324, 1, 0
      %v337 = vsel %vm325, 1, 0
      %v338 = vsel %vm326, 1, 0
      %v339 = vsel %vm327, 1, 0
      %v340 = vsel %vm328, 1, 0
      %v341 = vcvt.s32.f32 %v329
      %v342 = vcvt.s32.f32 %v330
      %v343 = vcvt.s32.f32 %v331
      %v344 = vcvt.s32.f32 %v332
      %v345 = vcvt.s32.f32 %v333
      %v346 = vcvt.s32.f32 %v334
      %v347 = vcvt.s32.f32 %v335
      %v348 = vcvt.s32.f32 %v336
      %v349 = vcvt.s32.f32 %v337
      %v350 = vcvt.s32.f32 %v338
      %v351 = vcvt.s32.f32 %v339
      %v352 = vcvt.s32.f32 %v340
      %v353 = vlaneseq
      %v354 = vshrl.u32 %v353, 7
      %v355 = vadd.s32 %v354, 8
      %v356 = vadd.s32 %v354, 16
      %v357 = vadd.s32 %v354, 24
      %v358 = vlaneseq
      %v359 = vshrl.u32 %v358, 7
      %v360 = vsub.s32 0, %v359
      %v361 = vrot.slane %v260, %v360
      %vm362 = vcmp.eq.s32.totalorder %v361, %v354
      %vm363 = vcmp.eq.s32.totalorder %v361, %v355
      %vm364 = vcmp.eq.s32.totalorder %v361, %v356
      %vm365 = vcmp.eq.s32.totalorder %v361, %v357
      %v366 = vsel %vm362, 1, 0
      %v367 = vsel %vm363, 1, 0
      %v368 = vsel %vm364, 1, 0
      %v369 = vsel %vm365, 1, 0
      %v370 = vcvt.s32.f32 %v366
      %v371 = vcvt.s32.f32 %v367
      %v372 = vcvt.s32.f32 %v368
      %v373 = vcvt.s32.f32 %v369
      %v374 = vlaneseq
      %v375 = vshrl.u32 %v374, 7
      %v376 = vsub.s32 0, %v375
      %v377 = vrot.slane %v262, %v376
      %vm378 = vcmask 31744
      %v380 = vsel %vm378, %v236, 0
      %v383 = vsel %vm378, %v237, 0
      %v386 = vsel %vm378, %v238, 0
      %v389 = vsel %vm378, %v239, 0
      %v392 = vsel %vm378, %v240, 0
      %v395 = vsel %vm378, %v241, 0
      %v398 = vsel %vm378, %v242, 0
      %v401 = vsel %vm378, %v243, 0
      %v404 = vsel %vm378, %v244, 0
      %v407 = vsel %vm378, %v245, 0
      %v410 = vsel %vm378, %v246, 0
      %v413 = vsel %vm378, %v247, 0
      %vm415 = vcmask 1043456
      %v417 = vsel %vm415, %v261, 0
      %419 = vmatprep.subr.mxu0 0.0
      %420 = vmatpush1.msra.mxu0 %v417
      %421 = vmatprep.subr.mxu0 0.0
      %422 = vmatpush1.msra.mxu0 0.0
      %423 = vmatprep.subr.mxu0 0.0
      %424 = vmatpush1.msra.mxu0 0.0
      %425 = vmatprep.subr.mxu0 0.0
      %426 = vmatpush1.msra.mxu0 0.0
      %427 = vmatprep.subr.mxu0 0.0
      %428 = vmatpush1.msra.mxu0 0.0
      %429 = vmatprep.subr.mxu0 0.0
      %430 = vmatpush1.msra.mxu0 0.0
      %431 = vmatprep.subr.mxu0 0.0
      %432 = vmatpush1.msra.mxu0 0.0
      %433 = vmatprep.subr.mxu0 0.0
      %434 = vmatpush1.msra.mxu0 0.0
      %435 = vmatprep.subr.mxu0 0.0
      %436 = vmatpush1.msra.mxu0 0.0
      %437 = vmatprep.subr.mxu0 0.0
      %438 = vmatpush1.msra.mxu0 0.0
      %439 = vmatprep.subr.mxu0 0.0
      %440 = vmatpush1.msra.mxu0 0.0
      %441 = vmatprep.subr.mxu0 0.0
      %442 = vmatpush1.msra.mxu0 0.0
      %443 = vmatprep.subr.mxu0 0.0
      %444 = vmatpush1.msra.mxu0 0.0
      %445 = vmatprep.subr.mxu0 0.0
      %446 = vmatpush1.msra.mxu0 0.0
      %447 = vmatprep.subr.mxu0 0.0
      %448 = vmatpush1.msra.mxu0 0.0
      %449 = vmatprep.subr.mxu0 0.0
      %450 = vmatpush1.msra.mxu0 0.0
      %451 = vmatprep.subr.mxu0 0.0
      %452 = vmatpush1.msra.mxu0 0.0
      %453 = vmatprep.subr.mxu0 0.0
      %454 = vmatpush1.msra.mxu0 0.0
      %455 = vmatprep.subr.mxu0 0.0
      %456 = vmatpush1.msra.mxu0 0.0
      %457 = vmatprep.subr.mxu0 0.0
      %458 = vmatpush1.msra.mxu0 0.0
      %459 = vmatprep.subr.mxu0 0.0
      %460 = vmatpush1.msra.mxu0 0.0
      %461 = vmatprep.subr.mxu0 0.0
      %462 = vmatpush1.msra.mxu0 0.0
      %463 = vmatprep.subr.mxu0 0.0
      %464 = vmatpush1.msra.mxu0 0.0
      %465 = vmatprep.subr.mxu0 0.0
      %466 = vmatpush1.msra.mxu0 0.0
      %467 = vmatprep.subr.mxu0 0.0
      %468 = vmatpush1.msra.mxu0 0.0
      %469 = vmatprep.subr.mxu0 0.0
      %470 = vmatpush1.msra.mxu0 0.0
      %471 = vmatprep.subr.mxu0 0.0
      %472 = vmatpush1.msra.mxu0 0.0
      %473 = vmatprep.subr.mxu0 0.0
      %474 = vmatpush1.msra.mxu0 0.0
      %475 = vmatprep.subr.mxu0 0.0
      %476 = vmatpush1.msra.mxu0 0.0
      %477 = vmatprep.subr.mxu0 0.0
      %478 = vmatpush1.msra.mxu0 0.0
      %479 = vmatprep.subr.mxu0 0.0
      %480 = vmatpush1.msra.mxu0 0.0
      %481 = vmatprep.subr.mxu0 0.0
      %482 = vmatpush1.msra.mxu0 0.0
      %483 = vmatprep.mubr.f32.mxu0 0.0
      %484 = vmatmul.mubr.f32.gmra.mrb[0].mxu0 %v380
      %v485 = vpop.f32.mrb[0].mxu0
      %v486 = vadd.f32 %v377, %v485
      %v487 = vpop.f32.mrb[0].mxu0
      %488 = vmatprep.mubr.f32.mxu0 0.0
      %489 = vmatmul.mubr.f32.gmra.mrb[0].mxu0 %v383
      %v490 = vpop.f32.mrb[0].mxu0
      %v491 = vadd.f32 %v377, %v490
      %v492 = vpop.f32.mrb[0].mxu0
      %493 = vmatprep.mubr.f32.mxu0 0.0
      %494 = vmatmul.mubr.f32.gmra.mrb[0].mxu0 %v386
      %v495 = vpop.f32.mrb[0].mxu0
      %v496 = vadd.f32 %v377, %v495
      %v497 = vpop.f32.mrb[0].mxu0
      %498 = vmatprep.mubr.f32.mxu0 0.0
      %499 = vmatmul.mubr.f32.gmra.mrb[0].mxu0 %v389
      %v500 = vpop.f32.mrb[0].mxu0
      %v501 = vadd.f32 %v377, %v500
      %v502 = vpop.f32.mrb[0].mxu0
      %503 = vmatprep.mubr.f32.mxu0 0.0
      %504 = vmatmul.mubr.f32.gmra.mrb[0].mxu0 %v392
      %v505 = vpop.f32.mrb[0].mxu0
      %v506 = vadd.f32 %v377, %v505
      %v507 = vpop.f32.mrb[0].mxu0
      %508 = vmatprep.mubr.f32.mxu0 0.0
      %509 = vmatmul.mubr.f32.gmra.mrb[0].mxu0 %v395
      %v510 = vpop.f32.mrb[0].mxu0
      %v511 = vadd.f32 %v377, %v510
      %v512 = vpop.f32.mrb[0].mxu0
      %513 = vmatprep.mubr.f32.mxu0 0.0
      %514 = vmatmul.mubr.f32.gmra.mrb[0].mxu0 %v398
      %v515 = vpop.f32.mrb[0].mxu0
      %v516 = vadd.f32 %v377, %v515
      %v517 = vpop.f32.mrb[0].mxu0
      %518 = vmatprep.mubr.f32.mxu0 0.0
      %519 = vmatmul.mubr.f32.gmra.mrb[0].mxu0 %v401
      %v520 = vpop.f32.mrb[0].mxu0
      %v521 = vadd.f32 %v377, %v520
      %v522 = vpop.f32.mrb[0].mxu0
      %523 = vmatprep.mubr.f32.mxu0 0.0
      %524 = vmatmul.mubr.f32.gmra.mrb[0].mxu0 %v404
      %v525 = vpop.f32.mrb[0].mxu0
      %v526 = vadd.f32 %v377, %v525
      %v527 = vpop.f32.mrb[0].mxu0
      %528 = vmatprep.mubr.f32.mxu0 0.0
      %529 = vmatmul.mubr.f32.gmra.mrb[0].mxu0 %v407
      %v530 = vpop.f32.mrb[0].mxu0
      %v531 = vadd.f32 %v377, %v530
      %v532 = vpop.f32.mrb[0].mxu0
      %533 = vmatprep.mubr.f32.mxu0 0.0
      %534 = vmatmul.mubr.f32.gmra.mrb[0].mxu0 %v410
      %v535 = vpop.f32.mrb[0].mxu0
      %v536 = vadd.f32 %v377, %v535
      %v537 = vpop.f32.mrb[0].mxu0
      %538 = vmatprep.mubr.f32.mxu0 0.0
      %539 = vmatmul.mubr.f32.gmra.mrb[0].mxu0 %v413
      %v540 = vpop.f32.mrb[0].mxu0
      %v541 = vadd.f32 %v377, %v540
      %v542 = vpop.f32.mrb[0].mxu0
      %543 = vdwg.mxu0
      %v544 = vmax.f32 %v486, 0.0
      %v545 = vmax.f32 %v491, 0.0
      %v546 = vmax.f32 %v496, 0.0
      %v547 = vmax.f32 %v501, 0.0
      %v548 = vmax.f32 %v506, 0.0
      %v549 = vmax.f32 %v511, 0.0
      %v550 = vmax.f32 %v516, 0.0
      %v551 = vmax.f32 %v521, 0.0
      %v552 = vmax.f32 %v526, 0.0
      %v553 = vmax.f32 %v531, 0.0
      %v554 = vmax.f32 %v536, 0.0
      %v555 = vmax.f32 %v541, 0.0
      %v556 = vlaneseq
      %v557 = vshrl.u32 %v556, 7
      %v558 = vsub.s32 0, %v557
      %v559 = vrot.slane %v265, %v558
      %vm560 = vcmask 130048
      %v562 = vsel %vm560, %v544, 0
      %v565 = vsel %vm560, %v545, 0
      %v568 = vsel %vm560, %v546, 0
      %v571 = vsel %vm560, %v547, 0
      %v574 = vsel %vm560, %v548, 0
      %v577 = vsel %vm560, %v549, 0
      %v580 = vsel %vm560, %v550, 0
      %v583 = vsel %vm560, %v551, 0
      %v586 = vsel %vm560, %v552, 0
      %v589 = vsel %vm560, %v553, 0
      %v592 = vsel %vm560, %v554, 0
      %v595 = vsel %vm560, %v555, 0
      %597 = vmatprep.subr.mxu0 0.0
      %598 = vmatpush1.msra.mxu0 %v263
      %599 = vmatprep.subr.mxu0 0.0
      %600 = vmatpush1.msra.mxu0 %v264
      %601 = vmatprep.subr.mxu0 0.0
      %602 = vmatpush1.msra.mxu0 0.0
      %603 = vmatprep.subr.mxu0 0.0
      %604 = vmatpush1.msra.mxu0 0.0
      %605 = vmatprep.subr.mxu0 0.0
      %606 = vmatpush1.msra.mxu0 0.0
      %607 = vmatprep.subr.mxu0 0.0
      %608 = vmatpush1.msra.mxu0 0.0
      %609 = vmatprep.subr.mxu0 0.0
      %610 = vmatpush1.msra.mxu0 0.0
      %611 = vmatprep.subr.mxu0 0.0
      %612 = vmatpush1.msra.mxu0 0.0
      %613 = vmatprep.subr.mxu0 0.0
      %614 = vmatpush1.msra.mxu0 0.0
      %615 = vmatprep.subr.mxu0 0.0
      %616 = vmatpush1.msra.mxu0 0.0
      %617 = vmatprep.subr.mxu0 0.0
      %618 = vmatpush1.msra.mxu0 0.0
      %619 = vmatprep.subr.mxu0 0.0
      %620 = vmatpush1.msra.mxu0 0.0
      %621 = vmatprep.subr.mxu0 0.0
      %622 = vmatpush1.msra.mxu0 0.0
      %623 = vmatprep.subr.mxu0 0.0
      %624 = vmatpush1.msra.mxu0 0.0
      %625 = vmatprep.subr.mxu0 0.0
      %626 = vmatpush1.msra.mxu0 0.0
      %627 = vmatprep.subr.mxu0 0.0
      %628 = vmatpush1.msra.mxu0 0.0
      %629 = vmatprep.subr.mxu0 0.0
      %630 = vmatpush1.msra.mxu0 0.0
      %631 = vmatprep.subr.mxu0 0.0
      %632 = vmatpush1.msra.mxu0 0.0
      %633 = vmatprep.subr.mxu0 0.0
      %634 = vmatpush1.msra.mxu0 0.0
      %635 = vmatprep.subr.mxu0 0.0
      %636 = vmatpush1.msra.mxu0 0.0
      %637 = vmatprep.subr.mxu0 0.0
      %638 = vmatpush1.msra.mxu0 0.0
      %639 = vmatprep.subr.mxu0 0.0
      %640 = vmatpush1.msra.mxu0 0.0
      %641 = vmatprep.subr.mxu0 0.0
      %642 = vmatpush1.msra.mxu0 0.0
      %643 = vmatprep.subr.mxu0 0.0
      %644 = vmatpush1.msra.mxu0 0.0
      %645 = vmatprep.subr.mxu0 0.0
      %646 = vmatpush1.msra.mxu0 0.0
      %647 = vmatprep.subr.mxu0 0.0
      %648 = vmatpush1.msra.mxu0 0.0
      %649 = vmatprep.subr.mxu0 0.0
      %650 = vmatpush1.msra.mxu0 0.0
      %651 = vmatprep.subr.mxu0 0.0
      %652 = vmatpush1.msra.mxu0 0.0
      %653 = vmatprep.subr.mxu0 0.0
      %654 = vmatpush1.msra.mxu0 0.0
      %655 = vmatprep.subr.mxu0 0.0
      %656 = vmatpush1.msra.mxu0 0.0
      %657 = vmatprep.subr.mxu0 0.0
      %658 = vmatpush1.msra.mxu0 0.0
      %659 = vmatprep.subr.mxu0 0.0
      %660 = vmatpush1.msra.mxu0 0.0
      %661 = vmatprep.mubr.f32.mxu0 0.0
      %662 = vmatmul.mubr.f32.gmra.mrb[0].mxu0 %v562
      %v663 = vpop.f32.mrb[0].mxu0
      %v664 = vadd.f32 %v559, %v663
      %v665 = vpop.f32.mrb[0].mxu0
      %666 = vmatprep.mubr.f32.mxu0 0.0
      %667 = vmatmul.mubr.f32.gmra.mrb[0].mxu0 %v565
      %v668 = vpop.f32.mrb[0].mxu0
      %v669 = vadd.f32 %v559, %v668
      %v670 = vpop.f32.mrb[0].mxu0
      %671 = vmatprep.mubr.f32.mxu0 0.0
      %672 = vmatmul.mubr.f32.gmra.mrb[0].mxu0 %v568
      %v673 = vpop.f32.mrb[0].mxu0
      %v674 = vadd.f32 %v559, %v673
      %v675 = vpop.f32.mrb[0].mxu0
      %676 = vmatprep.mubr.f32.mxu0 0.0
      %677 = vmatmul.mubr.f32.gmra.mrb[0].mxu0 %v571
      %v678 = vpop.f32.mrb[0].mxu0
      %v679 = vadd.f32 %v559, %v678
      %v680 = vpop.f32.mrb[0].mxu0
      %681 = vmatprep.mubr.f32.mxu0 0.0
      %682 = vmatmul.mubr.f32.gmra.mrb[0].mxu0 %v574
      %v683 = vpop.f32.mrb[0].mxu0
      %v684 = vadd.f32 %v559, %v683
      %v685 = vpop.f32.mrb[0].mxu0
      %686 = vmatprep.mubr.f32.mxu0 0.0
      %687 = vmatmul.mubr.f32.gmra.mrb[0].mxu0 %v577
      %v688 = vpop.f32.mrb[0].mxu0
      %v689 = vadd.f32 %v559, %v688
      %v690 = vpop.f32.mrb[0].mxu0
      %691 = vmatprep.mubr.f32.mxu0 0.0
      %692 = vmatmul.mubr.f32.gmra.mrb[0].mxu0 %v580
      %v693 = vpop.f32.mrb[0].mxu0
      %v694 = vadd.f32 %v559, %v693
      %v695 = vpop.f32.mrb[0].mxu0
      %696 = vmatprep.mubr.f32.mxu0 0.0
      %697 = vmatmul.mubr.f32.gmra.mrb[0].mxu0 %v583
      %v698 = vpop.f32.mrb[0].mxu0
      %v699 = vadd.f32 %v559, %v698
      %v700 = vpop.f32.mrb[0].mxu0
      %701 = vmatprep.mubr.f32.mxu0 0.0
      %702 = vmatmul.mubr.f32.gmra.mrb[0].mxu0 %v586
      %v703 = vpop.f32.mrb[0].mxu0
      %v704 = vadd.f32 %v559, %v703
      %v705 = vpop.f32.mrb[0].mxu0
      %706 = vmatprep.mubr.f32.mxu0 0.0
      %707 = vmatmul.mubr.f32.gmra.mrb[0].mxu0 %v589
      %v708 = vpop.f32.mrb[0].mxu0
      %v709 = vadd.f32 %v559, %v708
      %v710 = vpop.f32.mrb[0].mxu0
      %711 = vmatprep.mubr.f32.mxu0 0.0
      %712 = vmatmul.mubr.f32.gmra.mrb[0].mxu0 %v592
      %v713 = vpop.f32.mrb[0].mxu0
      %v714 = vadd.f32 %v559, %v713
      %v715 = vpop.f32.mrb[0].mxu0
      %716 = vmatprep.mubr.f32.mxu0 0.0
      %717 = vmatmul.mubr.f32.gmra.mrb[0].mxu0 %v595
      %v718 = vpop.f32.mrb[0].mxu0
      %v719 = vadd.f32 %v559, %v718
      %v720 = vpop.f32.mrb[0].mxu0
      %721 = vdwg.mxu0
      %vm722 = vcmask 261120
      %v724 = vsel %vm722, %v341, 0
      %v727 = vsel %vm722, %v342, 0
      %v730 = vsel %vm722, %v343, 0
      %v733 = vsel %vm722, %v344, 0
      %v736 = vsel %vm722, %v345, 0
      %v739 = vsel %vm722, %v346, 0
      %v742 = vsel %vm722, %v347, 0
      %v745 = vsel %vm722, %v348, 0
      %v748 = vsel %vm722, %v349, 0
      %v751 = vsel %vm722, %v350, 0
      %v754 = vsel %vm722, %v351, 0
      %v757 = vsel %vm722, %v352, 0
      %759 = vmatprep.subr.mxu0 0.0
      %760 = vmatpush1.msra.mxu0 %v232
      %761 = vmatprep.subr.mxu0 0.0
      %762 = vmatpush1.msra.mxu0 %v233
      %763 = vmatprep.subr.mxu0 0.0
      %764 = vmatpush1.msra.mxu0 %v234
      %765 = vmatprep.subr.mxu0 0.0
      %766 = vmatpush1.msra.mxu0 %v235
      %767 = vmatprep.subr.mxu0 0.0
      %768 = vmatpush1.msra.mxu0 0.0
      %769 = vmatprep.subr.mxu0 0.0
      %770 = vmatpush1.msra.mxu0 0.0
      %771 = vmatprep.subr.mxu0 0.0
      %772 = vmatpush1.msra.mxu0 0.0
      %773 = vmatprep.subr.mxu0 0.0
      %774 = vmatpush1.msra.mxu0 0.0
      %775 = vmatprep.subr.mxu0 0.0
      %776 = vmatpush1.msra.mxu0 0.0
      %777 = vmatprep.subr.mxu0 0.0
      %778 = vmatpush1.msra.mxu0 0.0
      %779 = vmatprep.subr.mxu0 0.0
      %780 = vmatpush1.msra.mxu0 0.0
      %781 = vmatprep.subr.mxu0 0.0
      %782 = vmatpush1.msra.mxu0 0.0
      %783 = vmatprep.subr.mxu0 0.0
      %784 = vmatpush1.msra.mxu0 0.0
      %785 = vmatprep.subr.mxu0 0.0
      %786 = vmatpush1.msra.mxu0 0.0
      %787 = vmatprep.subr.mxu0 0.0
      %788 = vmatpush1.msra.mxu0 0.0
      %789 = vmatprep.subr.mxu0 0.0
      %790 = vmatpush1.msra.mxu0 0.0
      %791 = vmatprep.subr.mxu0 0.0
      %792 = vmatpush1.msra.mxu0 0.0
      %793 = vmatprep.subr.mxu0 0.0
      %794 = vmatpush1.msra.mxu0 0.0
      %795 = vmatprep.subr.mxu0 0.0
      %796 = vmatpush1.msra.mxu0 0.0
      %797 = vmatprep.subr.mxu0 0.0
      %798 = vmatpush1.msra.mxu0 0.0
      %799 = vmatprep.subr.mxu0 0.0
      %800 = vmatpush1.msra.mxu0 0.0
      %801 = vmatprep.subr.mxu0 0.0
      %802 = vmatpush1.msra.mxu0 0.0
      %803 = vmatprep.subr.mxu0 0.0
      %804 = vmatpush1.msra.mxu0 0.0
      %805 = vmatprep.subr.mxu0 0.0
      %806 = vmatpush1.msra.mxu0 0.0
      %807 = vmatprep.subr.mxu0 0.0
      %808 = vmatpush1.msra.mxu0 0.0
      %809 = vmatprep.subr.mxu0 0.0
      %810 = vmatpush1.msra.mxu0 0.0
      %811 = vmatprep.subr.mxu0 0.0
      %812 = vmatpush1.msra.mxu0 0.0
      %813 = vmatprep.subr.mxu0 0.0
      %814 = vmatpush1.msra.mxu0 0.0
      %815 = vmatprep.subr.mxu0 0.0
      %816 = vmatpush1.msra.mxu0 0.0
      %817 = vmatprep.subr.mxu0 0.0
      %818 = vmatpush1.msra.mxu0 0.0
      %819 = vmatprep.subr.mxu0 0.0
      %820 = vmatpush1.msra.mxu0 0.0
      %821 = vmatprep.subr.mxu0 0.0
      %822 = vmatpush1.msra.mxu0 0.0
      %823 = vmatprep.mubr.f32.mxu0 0.0
      %824 = vmatmul.mubr.f32.gmra.mrb[0].mxu0 %v724
      %v825 = vpop.f32.mrb[0].mxu0
      %v826 = vadd.f32 0.0, %v825
      %v827 = vpop.f32.mrb[0].mxu0
      %828 = vmatprep.mubr.f32.mxu0 0.0
      %829 = vmatmul.mubr.f32.gmra.mrb[0].mxu0 %v727
      %v830 = vpop.f32.mrb[0].mxu0
      %v831 = vadd.f32 0.0, %v830
      %v832 = vpop.f32.mrb[0].mxu0
      %833 = vmatprep.mubr.f32.mxu0 0.0
      %834 = vmatmul.mubr.f32.gmra.mrb[0].mxu0 %v730
      %v835 = vpop.f32.mrb[0].mxu0
      %v836 = vadd.f32 0.0, %v835
      %v837 = vpop.f32.mrb[0].mxu0
      %838 = vmatprep.mubr.f32.mxu0 0.0
      %839 = vmatmul.mubr.f32.gmra.mrb[0].mxu0 %v733
      %v840 = vpop.f32.mrb[0].mxu0
      %v841 = vadd.f32 0.0, %v840
      %v842 = vpop.f32.mrb[0].mxu0
      %843 = vmatprep.mubr.f32.mxu0 0.0
      %844 = vmatmul.mubr.f32.gmra.mrb[0].mxu0 %v736
      %v845 = vpop.f32.mrb[0].mxu0
      %v846 = vadd.f32 0.0, %v845
      %v847 = vpop.f32.mrb[0].mxu0
      %848 = vmatprep.mubr.f32.mxu0 0.0
      %849 = vmatmul.mubr.f32.gmra.mrb[0].mxu0 %v739
      %v850 = vpop.f32.mrb[0].mxu0
      %v851 = vadd.f32 0.0, %v850
      %v852 = vpop.f32.mrb[0].mxu0
      %853 = vmatprep.mubr.f32.mxu0 0.0
      %854 = vmatmul.mubr.f32.gmra.mrb[0].mxu0 %v742
      %v855 = vpop.f32.mrb[0].mxu0
      %v856 = vadd.f32 0.0, %v855
      %v857 = vpop.f32.mrb[0].mxu0
      %858 = vmatprep.mubr.f32.mxu0 0.0
      %859 = vmatmul.mubr.f32.gmra.mrb[0].mxu0 %v745
      %v860 = vpop.f32.mrb[0].mxu0
      %v861 = vadd.f32 0.0, %v860
      %v862 = vpop.f32.mrb[0].mxu0
      %863 = vmatprep.mubr.f32.mxu0 0.0
      %864 = vmatmul.mubr.f32.gmra.mrb[0].mxu0 %v748
      %v865 = vpop.f32.mrb[0].mxu0
      %v866 = vadd.f32 0.0, %v865
      %v867 = vpop.f32.mrb[0].mxu0
      %868 = vmatprep.mubr.f32.mxu0 0.0
      %869 = vmatmul.mubr.f32.gmra.mrb[0].mxu0 %v751
      %v870 = vpop.f32.mrb[0].mxu0
      %v871 = vadd.f32 0.0, %v870
      %v872 = vpop.f32.mrb[0].mxu0
      %873 = vmatprep.mubr.f32.mxu0 0.0
      %874 = vmatmul.mubr.f32.gmra.mrb[0].mxu0 %v754
      %v875 = vpop.f32.mrb[0].mxu0
      %v876 = vadd.f32 0.0, %v875
      %v877 = vpop.f32.mrb[0].mxu0
      %878 = vmatprep.mubr.f32.mxu0 0.0
      %879 = vmatmul.mubr.f32.gmra.mrb[0].mxu0 %v757
      %v880 = vpop.f32.mrb[0].mxu0
      %v881 = vadd.f32 0.0, %v880
      %v882 = vpop.f32.mrb[0].mxu0
      %883 = vdwg.mxu0
      %vm884 = vcmask 64512
      %v886 = vsel %vm884, %v826, 0
      %v889 = vsel %vm884, %v831, 0
      %v892 = vsel %vm884, %v836, 0
      %v895 = vsel %vm884, %v841, 0
      %v898 = vsel %vm884, %v846, 0
      %v901 = vsel %vm884, %v851, 0
      %v904 = vsel %vm884, %v856, 0
      %v907 = vsel %vm884, %v861, 0
      %v910 = vsel %vm884, %v866, 0
      %v913 = vsel %vm884, %v871, 0
      %v916 = vsel %vm884, %v876, 0
      %v919 = vsel %vm884, %v881, 0
      %921 = vmatprep.subr.mxu0 0.0
      %922 = vmatpush1.msra.mxu0 %v270
      %923 = vmatprep.subr.mxu0 0.0
      %924 = vmatpush1.msra.mxu0 0.0
      %925 = vmatprep.subr.mxu0 0.0
      %926 = vmatpush1.msra.mxu0 0.0
      %927 = vmatprep.subr.mxu0 0.0
      %928 = vmatpush1.msra.mxu0 0.0
      %929 = vmatprep.subr.mxu0 0.0
      %930 = vmatpush1.msra.mxu0 0.0
      %931 = vmatprep.subr.mxu0 0.0
      %932 = vmatpush1.msra.mxu0 0.0
      %933 = vmatprep.subr.mxu0 0.0
      %934 = vmatpush1.msra.mxu0 0.0
      %935 = vmatprep.subr.mxu0 0.0
      %936 = vmatpush1.msra.mxu0 0.0
      %937 = vmatprep.subr.mxu0 0.0
      %938 = vmatpush1.msra.mxu0 0.0
      %939 = vmatprep.subr.mxu0 0.0
      %940 = vmatpush1.msra.mxu0 0.0
      %941 = vmatprep.subr.mxu0 0.0
      %942 = vmatpush1.msra.mxu0 0.0
      %943 = vmatprep.subr.mxu0 0.0
      %944 = vmatpush1.msra.mxu0 0.0
      %945 = vmatprep.subr.mxu0 0.0
      %946 = vmatpush1.msra.mxu0 0.0
      %947 = vmatprep.subr.mxu0 0.0
      %948 = vmatpush1.msra.mxu0 0.0
      %949 = vmatprep.subr.mxu0 0.0
      %950 = vmatpush1.msra.mxu0 0.0
      %951 = vmatprep.subr.mxu0 0.0
      %952 = vmatpush1.msra.mxu0 0.0
      %953 = vmatprep.subr.mxu0 0.0
      %954 = vmatpush1.msra.mxu0 0.0
      %955 = vmatprep.subr.mxu0 0.0
      %956 = vmatpush1.msra.mxu0 0.0
      %957 = vmatprep.subr.mxu0 0.0
      %958 = vmatpush1.msra.mxu0 0.0
      %959 = vmatprep.subr.mxu0 0.0
      %960 = vmatpush1.msra.mxu0 0.0
      %961 = vmatprep.subr.mxu0 0.0
      %962 = vmatpush1.msra.mxu0 0.0
      %963 = vmatprep.subr.mxu0 0.0
      %964 = vmatpush1.msra.mxu0 0.0
      %965 = vmatprep.subr.mxu0 0.0
      %966 = vmatpush1.msra.mxu0 0.0
      %967 = vmatprep.subr.mxu0 0.0
      %968 = vmatpush1.msra.mxu0 0.0
      %969 = vmatprep.subr.mxu0 0.0
      %970 = vmatpush1.msra.mxu0 0.0
      %971 = vmatprep.subr.mxu0 0.0
      %972 = vmatpush1.msra.mxu0 0.0
      %973 = vmatprep.subr.mxu0 0.0
      %974 = vmatpush1.msra.mxu0 0.0
      %975 = vmatprep.subr.mxu0 0.0
      %976 = vmatpush1.msra.mxu0 0.0
      %977 = vmatprep.subr.mxu0 0.0
      %978 = vmatpush1.msra.mxu0 0.0
      %979 = vmatprep.subr.mxu0 0.0
      %980 = vmatpush1.msra.mxu0 0.0
      %981 = vmatprep.subr.mxu0 0.0
      %982 = vmatpush1.msra.mxu0 0.0
      %983 = vmatprep.subr.mxu0 0.0
      %984 = vmatpush1.msra.mxu0 0.0
      %985 = vmatprep.mubr.f32.mxu0 0.0
      %986 = vmatmul.mubr.f32.gmra.mrb[0].mxu0 %v886
      %v987 = vpop.f32.mrb[0].mxu0
      %v988 = vadd.f32 0.0, %v987
      %v989 = vpop.f32.mrb[0].mxu0
      %990 = vmatprep.mubr.f32.mxu0 0.0
      %991 = vmatmul.mubr.f32.gmra.mrb[0].mxu0 %v889
      %v992 = vpop.f32.mrb[0].mxu0
      %v993 = vadd.f32 0.0, %v992
      %v994 = vpop.f32.mrb[0].mxu0
      %995 = vmatprep.mubr.f32.mxu0 0.0
      %996 = vmatmul.mubr.f32.gmra.mrb[0].mxu0 %v892
      %v997 = vpop.f32.mrb[0].mxu0
      %v998 = vadd.f32 0.0, %v997
      %v999 = vpop.f32.mrb[0].mxu0
      %1000 = vmatprep.mubr.f32.mxu0 0.0
      %1001 = vmatmul.mubr.f32.gmra.mrb[0].mxu0 %v895
      %v1002 = vpop.f32.mrb[0].mxu0
      %v1003 = vadd.f32 0.0, %v1002
      %v1004 = vpop.f32.mrb[0].mxu0
      %1005 = vmatprep.mubr.f32.mxu0 0.0
      %1006 = vmatmul.mubr.f32.gmra.mrb[0].mxu0 %v898
      %v1007 = vpop.f32.mrb[0].mxu0
      %v1008 = vadd.f32 0.0, %v1007
      %v1009 = vpop.f32.mrb[0].mxu0
      %1010 = vmatprep.mubr.f32.mxu0 0.0
      %1011 = vmatmul.mubr.f32.gmra.mrb[0].mxu0 %v901
      %v1012 = vpop.f32.mrb[0].mxu0
      %v1013 = vadd.f32 0.0, %v1012
      %v1014 = vpop.f32.mrb[0].mxu0
      %1015 = vmatprep.mubr.f32.mxu0 0.0
      %1016 = vmatmul.mubr.f32.gmra.mrb[0].mxu0 %v904
      %v1017 = vpop.f32.mrb[0].mxu0
      %v1018 = vadd.f32 0.0, %v1017
      %v1019 = vpop.f32.mrb[0].mxu0
      %1020 = vmatprep.mubr.f32.mxu0 0.0
      %1021 = vmatmul.mubr.f32.gmra.mrb[0].mxu0 %v907
      %v1022 = vpop.f32.mrb[0].mxu0
      %v1023 = vadd.f32 0.0, %v1022
      %v1024 = vpop.f32.mrb[0].mxu0
      %1025 = vmatprep.mubr.f32.mxu0 0.0
      %1026 = vmatmul.mubr.f32.gmra.mrb[0].mxu0 %v910
      %v1027 = vpop.f32.mrb[0].mxu0
      %v1028 = vadd.f32 0.0, %v1027
      %v1029 = vpop.f32.mrb[0].mxu0
      %1030 = vmatprep.mubr.f32.mxu0 0.0
      %1031 = vmatmul.mubr.f32.gmra.mrb[0].mxu0 %v913
      %v1032 = vpop.f32.mrb[0].mxu0
      %v1033 = vadd.f32 0.0, %v1032
      %v1034 = vpop.f32.mrb[0].mxu0
      %1035 = vmatprep.mubr.f32.mxu0 0.0
      %1036 = vmatmul.mubr.f32.gmra.mrb[0].mxu0 %v916
      %v1037 = vpop.f32.mrb[0].mxu0
      %v1038 = vadd.f32 0.0, %v1037
      %v1039 = vpop.f32.mrb[0].mxu0
      %1040 = vmatprep.mubr.f32.mxu0 0.0
      %1041 = vmatmul.mubr.f32.gmra.mrb[0].mxu0 %v919
      %v1042 = vpop.f32.mrb[0].mxu0
      %v1043 = vadd.f32 0.0, %v1042
      %v1044 = vpop.f32.mrb[0].mxu0
      %1045 = vdwg.mxu0
      %v1046 = vmul.f32 %v988, %v664
      %v1047 = vmul.f32 %v993, %v669
      %v1048 = vmul.f32 %v998, %v674
      %v1049 = vmul.f32 %v1003, %v679
      %v1050 = vmul.f32 %v1008, %v684
      %v1051 = vmul.f32 %v1013, %v689
      %v1052 = vmul.f32 %v1018, %v694
      %v1053 = vmul.f32 %v1023, %v699
      %v1054 = vmul.f32 %v1028, %v704
      %v1055 = vmul.f32 %v1033, %v709
      %v1056 = vmul.f32 %v1038, %v714
      %v1057 = vmul.f32 %v1043, %v719
      %vm1058 = vcmask 523264
      %v1060 = vsel %vm1058, %v1046, 0
      %v1063 = vsel %vm1058, %v1047, 0
      %v1066 = vsel %vm1058, %v1048, 0
      %v1069 = vsel %vm1058, %v1049, 0
      %v1072 = vsel %vm1058, %v1050, 0
      %v1075 = vsel %vm1058, %v1051, 0
      %v1078 = vsel %vm1058, %v1052, 0
      %v1081 = vsel %vm1058, %v1053, 0
      %v1084 = vsel %vm1058, %v1054, 0
      %v1087 = vsel %vm1058, %v1055, 0
      %v1090 = vsel %vm1058, %v1056, 0
      %v1093 = vsel %vm1058, %v1057, 0
      %1095 = vmatprep.subr.mxu0 0.0
      %1096 = vmatpush1.msra.mxu0 %v271
      %1097 = vmatprep.subr.mxu0 0.0
      %1098 = vmatpush1.msra.mxu0 %v272
      %1099 = vmatprep.subr.mxu0 0.0
      %1100 = vmatpush1.msra.mxu0 %v273
      %1101 = vmatprep.subr.mxu0 0.0
      %1102 = vmatpush1.msra.mxu0 %v274
      %1103 = vmatprep.subr.mxu0 0.0
      %1104 = vmatpush1.msra.mxu0 %v275
      %1105 = vmatprep.subr.mxu0 0.0
      %1106 = vmatpush1.msra.mxu0 %v276
      %1107 = vmatprep.subr.mxu0 0.0
      %1108 = vmatpush1.msra.mxu0 %v277
      %1109 = vmatprep.subr.mxu0 0.0
      %1110 = vmatpush1.msra.mxu0 %v278
      %1111 = vmatprep.subr.mxu0 0.0
      %1112 = vmatpush1.msra.mxu0 0.0
      %1113 = vmatprep.subr.mxu0 0.0
      %1114 = vmatpush1.msra.mxu0 0.0
      %1115 = vmatprep.subr.mxu0 0.0
      %1116 = vmatpush1.msra.mxu0 0.0
      %1117 = vmatprep.subr.mxu0 0.0
      %1118 = vmatpush1.msra.mxu0 0.0
      %1119 = vmatprep.subr.mxu0 0.0
      %1120 = vmatpush1.msra.mxu0 0.0
      %1121 = vmatprep.subr.mxu0 0.0
      %1122 = vmatpush1.msra.mxu0 0.0
      %1123 = vmatprep.subr.mxu0 0.0
      %1124 = vmatpush1.msra.mxu0 0.0
      %1125 = vmatprep.subr.mxu0 0.0
      %1126 = vmatpush1.msra.mxu0 0.0
      %1127 = vmatprep.subr.mxu0 0.0
      %1128 = vmatpush1.msra.mxu0 0.0
      %1129 = vmatprep.subr.mxu0 0.0
      %1130 = vmatpush1.msra.mxu0 0.0
      %1131 = vmatprep.subr.mxu0 0.0
      %1132 = vmatpush1.msra.mxu0 0.0
      %1133 = vmatprep.subr.mxu0 0.0
      %1134 = vmatpush1.msra.mxu0 0.0
      %1135 = vmatprep.subr.mxu0 0.0
      %1136 = vmatpush1.msra.mxu0 0.0
      %1137 = vmatprep.subr.mxu0 0.0
      %1138 = vmatpush1.msra.mxu0 0.0
      %1139 = vmatprep.subr.mxu0 0.0
      %1140 = vmatpush1.msra.mxu0 0.0
      %1141 = vmatprep.subr.mxu0 0.0
      %1142 = vmatpush1.msra.mxu0 0.0
      %1143 = vmatprep.subr.mxu0 0.0
      %1144 = vmatpush1.msra.mxu0 0.0
      %1145 = vmatprep.subr.mxu0 0.0
      %1146 = vmatpush1.msra.mxu0 0.0
      %1147 = vmatprep.subr.mxu0 0.0
      %1148 = vmatpush1.msra.mxu0 0.0
      %1149 = vmatprep.subr.mxu0 0.0
      %1150 = vmatpush1.msra.mxu0 0.0
      %1151 = vmatprep.subr.mxu0 0.0
      %1152 = vmatpush1.msra.mxu0 0.0
      %1153 = vmatprep.subr.mxu0 0.0
      %1154 = vmatpush1.msra.mxu0 0.0
      %1155 = vmatprep.subr.mxu0 0.0
      %1156 = vmatpush1.msra.mxu0 0.0
      %1157 = vmatprep.subr.mxu0 0.0
      %1158 = vmatpush1.msra.mxu0 0.0
      %1159 = vmatprep.mubr.f32.mxu0 0.0
      %1160 = vmatmul.mubr.f32.gmra.mrb[0].mxu0 %v1060
      %v1161 = vpop.f32.mrb[0].mxu0
      %v1162 = vadd.f32 0.0, %v1161
      %v1163 = vpop.f32.mrb[0].mxu0
      %1164 = vmatprep.mubr.f32.mxu0 0.0
      %1165 = vmatmul.mubr.f32.gmra.mrb[0].mxu0 %v1063
      %v1166 = vpop.f32.mrb[0].mxu0
      %v1167 = vadd.f32 0.0, %v1166
      %v1168 = vpop.f32.mrb[0].mxu0
      %1169 = vmatprep.mubr.f32.mxu0 0.0
      %1170 = vmatmul.mubr.f32.gmra.mrb[0].mxu0 %v1066
      %v1171 = vpop.f32.mrb[0].mxu0
      %v1172 = vadd.f32 0.0, %v1171
      %v1173 = vpop.f32.mrb[0].mxu0
      %1174 = vmatprep.mubr.f32.mxu0 0.0
      %1175 = vmatmul.mubr.f32.gmra.mrb[0].mxu0 %v1069
      %v1176 = vpop.f32.mrb[0].mxu0
      %v1177 = vadd.f32 0.0, %v1176
      %v1178 = vpop.f32.mrb[0].mxu0
      %1179 = vmatprep.mubr.f32.mxu0 0.0
      %1180 = vmatmul.mubr.f32.gmra.mrb[0].mxu0 %v1072
      %v1181 = vpop.f32.mrb[0].mxu0
      %v1182 = vadd.f32 0.0, %v1181
      %v1183 = vpop.f32.mrb[0].mxu0
      %1184 = vmatprep.mubr.f32.mxu0 0.0
      %1185 = vmatmul.mubr.f32.gmra.mrb[0].mxu0 %v1075
      %v1186 = vpop.f32.mrb[0].mxu0
      %v1187 = vadd.f32 0.0, %v1186
      %v1188 = vpop.f32.mrb[0].mxu0
      %1189 = vmatprep.mubr.f32.mxu0 0.0
      %1190 = vmatmul.mubr.f32.gmra.mrb[0].mxu0 %v1078
      %v1191 = vpop.f32.mrb[0].mxu0
      %v1192 = vadd.f32 0.0, %v1191
      %v1193 = vpop.f32.mrb[0].mxu0
      %1194 = vmatprep.mubr.f32.mxu0 0.0
      %1195 = vmatmul.mubr.f32.gmra.mrb[0].mxu0 %v1081
      %v1196 = vpop.f32.mrb[0].mxu0
      %v1197 = vadd.f32 0.0, %v1196
      %v1198 = vpop.f32.mrb[0].mxu0
      %1199 = vmatprep.mubr.f32.mxu0 0.0
      %1200 = vmatmul.mubr.f32.gmra.mrb[0].mxu0 %v1084
      %v1201 = vpop.f32.mrb[0].mxu0
      %v1202 = vadd.f32 0.0, %v1201
      %v1203 = vpop.f32.mrb[0].mxu0
      %1204 = vmatprep.mubr.f32.mxu0 0.0
      %1205 = vmatmul.mubr.f32.gmra.mrb[0].mxu0 %v1087
      %v1206 = vpop.f32.mrb[0].mxu0
      %v1207 = vadd.f32 0.0, %v1206
      %v1208 = vpop.f32.mrb[0].mxu0
      %1209 = vmatprep.mubr.f32.mxu0 0.0
      %1210 = vmatmul.mubr.f32.gmra.mrb[0].mxu0 %v1090
      %v1211 = vpop.f32.mrb[0].mxu0
      %v1212 = vadd.f32 0.0, %v1211
      %v1213 = vpop.f32.mrb[0].mxu0
      %1214 = vmatprep.mubr.f32.mxu0 0.0
      %1215 = vmatmul.mubr.f32.gmra.mrb[0].mxu0 %v1093
      %v1216 = vpop.f32.mrb[0].mxu0
      %v1217 = vadd.f32 0.0, %v1216
      %v1218 = vpop.f32.mrb[0].mxu0
      %1219 = vdwg.mxu0
      %vm1220 = vcmask 785408
      %v1222 = vsel %vm1220, %v370, 0
      %v1225 = vsel %vm1220, %v371, 0
      %v1228 = vsel %vm1220, %v372, 0
      %v1231 = vsel %vm1220, %v373, 0
      %1233 = vmatprep.subr.mxu0 0.0
      %1234 = vmatpush1.msra.mxu0 %v1162
      %1235 = vmatprep.subr.mxu0 0.0
      %1236 = vmatpush1.msra.mxu0 %v1167
      %1237 = vmatprep.subr.mxu0 0.0
      %1238 = vmatpush1.msra.mxu0 %v1172
      %1239 = vmatprep.subr.mxu0 0.0
      %1240 = vmatpush1.msra.mxu0 %v1177
      %1241 = vmatprep.subr.mxu0 0.0
      %1242 = vmatpush1.msra.mxu0 %v1182
      %1243 = vmatprep.subr.mxu0 0.0
      %1244 = vmatpush1.msra.mxu0 %v1187
      %1245 = vmatprep.subr.mxu0 0.0
      %1246 = vmatpush1.msra.mxu0 %v1192
      %1247 = vmatprep.subr.mxu0 0.0
      %1248 = vmatpush1.msra.mxu0 %v1197
      %1249 = vmatprep.subr.mxu0 0.0
      %1250 = vmatpush1.msra.mxu0 %v1202
      %1251 = vmatprep.subr.mxu0 0.0
      %1252 = vmatpush1.msra.mxu0 %v1207
      %1253 = vmatprep.subr.mxu0 0.0
      %1254 = vmatpush1.msra.mxu0 %v1212
      %1255 = vmatprep.subr.mxu0 0.0
      %1256 = vmatpush1.msra.mxu0 %v1217
      %1257 = vmatprep.subr.mxu0 0.0
      %1258 = vmatpush1.msra.mxu0 0.0
      %1259 = vmatprep.subr.mxu0 0.0
      %1260 = vmatpush1.msra.mxu0 0.0
      %1261 = vmatprep.subr.mxu0 0.0
      %1262 = vmatpush1.msra.mxu0 0.0
      %1263 = vmatprep.subr.mxu0 0.0
      %1264 = vmatpush1.msra.mxu0 0.0
      %1265 = vmatprep.subr.mxu0 0.0
      %1266 = vmatpush1.msra.mxu0 0.0
      %1267 = vmatprep.subr.mxu0 0.0
      %1268 = vmatpush1.msra.mxu0 0.0
      %1269 = vmatprep.subr.mxu0 0.0
      %1270 = vmatpush1.msra.mxu0 0.0
      %1271 = vmatprep.subr.mxu0 0.0
      %1272 = vmatpush1.msra.mxu0 0.0
      %1273 = vmatprep.subr.mxu0 0.0
      %1274 = vmatpush1.msra.mxu0 0.0
      %1275 = vmatprep.subr.mxu0 0.0
      %1276 = vmatpush1.msra.mxu0 0.0
      %1277 = vmatprep.subr.mxu0 0.0
      %1278 = vmatpush1.msra.mxu0 0.0
      %1279 = vmatprep.subr.mxu0 0.0
      %1280 = vmatpush1.msra.mxu0 0.0
      %1281 = vmatprep.subr.mxu0 0.0
      %1282 = vmatpush1.msra.mxu0 0.0
      %1283 = vmatprep.subr.mxu0 0.0
      %1284 = vmatpush1.msra.mxu0 0.0
      %1285 = vmatprep.subr.mxu0 0.0
      %1286 = vmatpush1.msra.mxu0 0.0
      %1287 = vmatprep.subr.mxu0 0.0
      %1288 = vmatpush1.msra.mxu0 0.0
      %1289 = vmatprep.subr.mxu0 0.0
      %1290 = vmatpush1.msra.mxu0 0.0
      %1291 = vmatprep.subr.mxu0 0.0
      %1292 = vmatpush1.msra.mxu0 0.0
      %1293 = vmatprep.subr.mxu0 0.0
      %1294 = vmatpush1.msra.mxu0 0.0
      %1295 = vmatprep.subr.mxu0 0.0
      %1296 = vmatpush1.msra.mxu0 0.0
      %1297 = vmatprep.mubr.f32.mxu0 0.0
      %1298 = vmatmul.mubr.f32.gmra.mrb[0].mxu0 %v1222
      %v1299 = vpop.f32.mrb[0].mxu0
      %v1300 = vadd.f32 0.0, %v1299
      %v1301 = vpop.f32.mrb[0].mxu0
      %1302 = vmatprep.mubr.f32.mxu0 0.0
      %1303 = vmatmul.mubr.f32.gmra.mrb[0].mxu0 %v1225
      %v1304 = vpop.f32.mrb[0].mxu0
      %v1305 = vadd.f32 0.0, %v1304
      %v1306 = vpop.f32.mrb[0].mxu0
      %1307 = vmatprep.mubr.f32.mxu0 0.0
      %1308 = vmatmul.mubr.f32.gmra.mrb[0].mxu0 %v1228
      %v1309 = vpop.f32.mrb[0].mxu0
      %v1310 = vadd.f32 0.0, %v1309
      %v1311 = vpop.f32.mrb[0].mxu0
      %1312 = vmatprep.mubr.f32.mxu0 0.0
      %1313 = vmatmul.mubr.f32.gmra.mrb[0].mxu0 %v1231
      %v1314 = vpop.f32.mrb[0].mxu0
      %v1315 = vadd.f32 0.0, %v1314
      %v1316 = vpop.f32.mrb[0].mxu0
      %1317 = vdwg.mxu0
      %1318 = vmatprep.subr.mxu0 0.0
      %1319 = vmatpush1.msra.mxu0 1.0
      %1320 = vmatprep.subr.mxu0 0.0
      %1321 = vmatpush1.msra.mxu0 1.0
      %1322 = vmatprep.subr.mxu0 0.0
      %1323 = vmatpush1.msra.mxu0 1.0
      %1324 = vmatprep.subr.mxu0 0.0
      %1325 = vmatpush1.msra.mxu0 1.0
      %1326 = vmatprep.subr.mxu0 0.0
      %1327 = vmatpush1.msra.mxu0 1.0
      %1328 = vmatprep.subr.mxu0 0.0
      %1329 = vmatpush1.msra.mxu0 1.0
      %1330 = vmatprep.subr.mxu0 0.0
      %1331 = vmatpush1.msra.mxu0 1.0
      %1332 = vmatprep.subr.mxu0 0.0
      %1333 = vmatpush1.msra.mxu0 1.0
      %1334 = vmatprep.subr.mxu0 0.0
      %1335 = vmatpush1.msra.mxu0 1.0
      %1336 = vmatprep.subr.mxu0 0.0
      %1337 = vmatpush1.msra.mxu0 1.0
      %1338 = vmatprep.subr.mxu0 0.0
      %1339 = vmatpush1.msra.mxu0 1.0
      %1340 = vmatprep.subr.mxu0 0.0
      %1341 = vmatpush1.msra.mxu0 1.0
      %1342 = vmatprep.subr.mxu0 0.0
      %1343 = vmatpush1.msra.mxu0 0.0
      %1344 = vmatprep.subr.mxu0 0.0
      %1345 = vmatpush1.msra.mxu0 0.0
      %1346 = vmatprep.subr.mxu0 0.0
      %1347 = vmatpush1.msra.mxu0 0.0
      %1348 = vmatprep.subr.mxu0 0.0
      %1349 = vmatpush1.msra.mxu0 0.0
      %1350 = vmatprep.subr.mxu0 0.0
      %1351 = vmatpush1.msra.mxu0 0.0
      %1352 = vmatprep.subr.mxu0 0.0
      %1353 = vmatpush1.msra.mxu0 0.0
      %1354 = vmatprep.subr.mxu0 0.0
      %1355 = vmatpush1.msra.mxu0 0.0
      %1356 = vmatprep.subr.mxu0 0.0
      %1357 = vmatpush1.msra.mxu0 0.0
      %1358 = vmatprep.subr.mxu0 0.0
      %1359 = vmatpush1.msra.mxu0 0.0
      %1360 = vmatprep.subr.mxu0 0.0
      %1361 = vmatpush1.msra.mxu0 0.0
      %1362 = vmatprep.subr.mxu0 0.0
      %1363 = vmatpush1.msra.mxu0 0.0
      %1364 = vmatprep.subr.mxu0 0.0
      %1365 = vmatpush1.msra.mxu0 0.0
      %1366 = vmatprep.subr.mxu0 0.0
      %1367 = vmatpush1.msra.mxu0 0.0
      %1368 = vmatprep.subr.mxu0 0.0
      %1369 = vmatpush1.msra.mxu0 0.0
      %1370 = vmatprep.subr.mxu0 0.0
      %1371 = vmatpush1.msra.mxu0 0.0
      %1372 = vmatprep.subr.mxu0 0.0
      %1373 = vmatpush1.msra.mxu0 0.0
      %1374 = vmatprep.subr.mxu0 0.0
      %1375 = vmatpush1.msra.mxu0 0.0
      %1376 = vmatprep.subr.mxu0 0.0
      %1377 = vmatpush1.msra.mxu0 0.0
      %1378 = vmatprep.subr.mxu0 0.0
      %1379 = vmatpush1.msra.mxu0 0.0
      %1380 = vmatprep.subr.mxu0 0.0
      %1381 = vmatpush1.msra.mxu0 0.0
      %1382 = vmatprep.mubr.f32.mxu0 0.0
      %1383 = vmatmul.mubr.f32.gmra.mrb[0].mxu0 %v1222
      %v1384 = vpop.f32.mrb[0].mxu0
      %v1385 = vadd.f32 0.0, %v1384
      %v1386 = vpop.f32.mrb[0].mxu0
      %1387 = vmatprep.mubr.f32.mxu0 0.0
      %1388 = vmatmul.mubr.f32.gmra.mrb[0].mxu0 %v1225
      %v1389 = vpop.f32.mrb[0].mxu0
      %v1390 = vadd.f32 0.0, %v1389
      %v1391 = vpop.f32.mrb[0].mxu0
      %1392 = vmatprep.mubr.f32.mxu0 0.0
      %1393 = vmatmul.mubr.f32.gmra.mrb[0].mxu0 %v1228
      %v1394 = vpop.f32.mrb[0].mxu0
      %v1395 = vadd.f32 0.0, %v1394
      %v1396 = vpop.f32.mrb[0].mxu0
      %1397 = vmatprep.mubr.f32.mxu0 0.0
      %1398 = vmatmul.mubr.f32.gmra.mrb[0].mxu0 %v1231
      %v1399 = vpop.f32.mrb[0].mxu0
      %v1400 = vadd.f32 0.0, %v1399
      %v1401 = vpop.f32.mrb[0].mxu0
      %1402 = vdwg.mxu0
      %v1403 = vmax.f32 %v1385, 1.0
      %v1404 = vmax.f32 %v1390, 1.0
      %v1405 = vmax.f32 %v1395, 1.0
      %v1406 = vmax.f32 %v1400, 1.0
      %v1407 = vrcp.pop %v1403
      %v1408 = vmul.f32 1.0, %v1407
      %v1409 = vrcp.pop %v1404
      %v1410 = vmul.f32 1.0, %v1409
      %v1411 = vrcp.pop %v1405
      %v1412 = vmul.f32 1.0, %v1411
      %v1413 = vrcp.pop %v1406
      %v1414 = vmul.f32 1.0, %v1413
      %1416 = vset.pattern.permute.xlu0 0
      %1417 = vperm.xlu0 %1416, %v1408
      %v1418 = vpop.permute.xlu0 %1417
      %1421 = vset.pattern.permute.xlu0 0
      %1422 = vperm.xlu0 %1421, %v1410
      %v1423 = vpop.permute.xlu0 %1422
      %1426 = vset.pattern.permute.xlu0 0
      %1427 = vperm.xlu0 %1426, %v1412
      %v1428 = vpop.permute.xlu0 %1427
      %1431 = vset.pattern.permute.xlu0 0
      %1432 = vperm.xlu0 %1431, %v1414
      %v1433 = vpop.permute.xlu0 %1432
      %v1435 = vmul.f32 %v1300, %v1418
      %v1436 = vmul.f32 %v1305, %v1423
      %v1437 = vmul.f32 %v1310, %v1428
      %v1438 = vmul.f32 %v1315, %v1433
      %v1440 = vsel %vm884, %v232, 0
      %v1443 = vsel %vm884, %v233, 0
      %v1446 = vsel %vm884, %v234, 0
      %v1449 = vsel %vm884, %v235, 0
      %1451 = vmatprep.subr.mxu0 0.0
      %1452 = vmatpush1.msra.mxu0 %v266
      %1453 = vmatprep.subr.mxu0 0.0
      %1454 = vmatpush1.msra.mxu0 0.0
      %1455 = vmatprep.subr.mxu0 0.0
      %1456 = vmatpush1.msra.mxu0 0.0
      %1457 = vmatprep.subr.mxu0 0.0
      %1458 = vmatpush1.msra.mxu0 0.0
      %1459 = vmatprep.subr.mxu0 0.0
      %1460 = vmatpush1.msra.mxu0 0.0
      %1461 = vmatprep.subr.mxu0 0.0
      %1462 = vmatpush1.msra.mxu0 0.0
      %1463 = vmatprep.subr.mxu0 0.0
      %1464 = vmatpush1.msra.mxu0 0.0
      %1465 = vmatprep.subr.mxu0 0.0
      %1466 = vmatpush1.msra.mxu0 0.0
      %1467 = vmatprep.subr.mxu0 0.0
      %1468 = vmatpush1.msra.mxu0 0.0
      %1469 = vmatprep.subr.mxu0 0.0
      %1470 = vmatpush1.msra.mxu0 0.0
      %1471 = vmatprep.subr.mxu0 0.0
      %1472 = vmatpush1.msra.mxu0 0.0
      %1473 = vmatprep.subr.mxu0 0.0
      %1474 = vmatpush1.msra.mxu0 0.0
      %1475 = vmatprep.subr.mxu0 0.0
      %1476 = vmatpush1.msra.mxu0 0.0
      %1477 = vmatprep.subr.mxu0 0.0
      %1478 = vmatpush1.msra.mxu0 0.0
      %1479 = vmatprep.subr.mxu0 0.0
      %1480 = vmatpush1.msra.mxu0 0.0
      %1481 = vmatprep.subr.mxu0 0.0
      %1482 = vmatpush1.msra.mxu0 0.0
      %1483 = vmatprep.subr.mxu0 0.0
      %1484 = vmatpush1.msra.mxu0 0.0
      %1485 = vmatprep.subr.mxu0 0.0
      %1486 = vmatpush1.msra.mxu0 0.0
      %1487 = vmatprep.subr.mxu0 0.0
      %1488 = vmatpush1.msra.mxu0 0.0
      %1489 = vmatprep.subr.mxu0 0.0
      %1490 = vmatpush1.msra.mxu0 0.0
      %1491 = vmatprep.subr.mxu0 0.0
      %1492 = vmatpush1.msra.mxu0 0.0
      %1493 = vmatprep.subr.mxu0 0.0
      %1494 = vmatpush1.msra.mxu0 0.0
      %1495 = vmatprep.subr.mxu0 0.0
      %1496 = vmatpush1.msra.mxu0 0.0
      %1497 = vmatprep.subr.mxu0 0.0
      %1498 = vmatpush1.msra.mxu0 0.0
      %1499 = vmatprep.subr.mxu0 0.0
      %1500 = vmatpush1.msra.mxu0 0.0
      %1501 = vmatprep.subr.mxu0 0.0
      %1502 = vmatpush1.msra.mxu0 0.0
      %1503 = vmatprep.subr.mxu0 0.0
      %1504 = vmatpush1.msra.mxu0 0.0
      %1505 = vmatprep.subr.mxu0 0.0
      %1506 = vmatpush1.msra.mxu0 0.0
      %1507 = vmatprep.subr.mxu0 0.0
      %1508 = vmatpush1.msra.mxu0 0.0
      %1509 = vmatprep.subr.mxu0 0.0
      %1510 = vmatpush1.msra.mxu0 0.0
      %1511 = vmatprep.subr.mxu0 0.0
      %1512 = vmatpush1.msra.mxu0 0.0
      %1513 = vmatprep.subr.mxu0 0.0
      %1514 = vmatpush1.msra.mxu0 0.0
      %1515 = vmatprep.mubr.f32.mxu0 0.0
      %1516 = vmatmul.mubr.f32.gmra.mrb[0].mxu0 %v1440
      %v1517 = vpop.f32.mrb[0].mxu0
      %v1518 = vadd.f32 0.0, %v1517
      %v1519 = vpop.f32.mrb[0].mxu0
      %1520 = vmatprep.mubr.f32.mxu0 0.0
      %1521 = vmatmul.mubr.f32.gmra.mrb[0].mxu0 %v1443
      %v1522 = vpop.f32.mrb[0].mxu0
      %v1523 = vadd.f32 0.0, %v1522
      %v1524 = vpop.f32.mrb[0].mxu0
      %1525 = vmatprep.mubr.f32.mxu0 0.0
      %1526 = vmatmul.mubr.f32.gmra.mrb[0].mxu0 %v1446
      %v1527 = vpop.f32.mrb[0].mxu0
      %v1528 = vadd.f32 0.0, %v1527
      %v1529 = vpop.f32.mrb[0].mxu0
      %1530 = vmatprep.mubr.f32.mxu0 0.0
      %1531 = vmatmul.mubr.f32.gmra.mrb[0].mxu0 %v1449
      %v1532 = vpop.f32.mrb[0].mxu0
      %v1533 = vadd.f32 0.0, %v1532
      %v1534 = vpop.f32.mrb[0].mxu0
      %1535 = vdwg.mxu0
      %v1536 = vadd.f32 %v1435, %v1518
      %v1537 = vadd.f32 %v1436, %v1523
      %v1538 = vadd.f32 %v1437, %v1528
      %v1539 = vadd.f32 %v1438, %v1533
      %v1540 = vlaneseq
      %v1541 = vshrl.u32 %v1540, 7
      %v1542 = vsub.s32 0, %v1541
      %v1543 = vrot.slane %v267, %v1542
      %v1544 = vadd.f32 %v1536, %v1543
      %v1545 = vadd.f32 %v1537, %v1543
      %v1546 = vadd.f32 %v1538, %v1543
      %v1547 = vadd.f32 %v1539, %v1543
      %v1548 = vshra.s32 %v354, 4
      %v1549 = vshra.s32 %v355, 4
      %v1550 = vshra.s32 %v356, 4
      %v1551 = vshra.s32 %v357, 4
      %v1552 = vshra.s32 %v280, 4
      %vm1553 = vcmp.eq.s32.totalorder %v1548, %v1552
      %vm1554 = vcmp.eq.s32.totalorder %v1549, %v1552
      %vm1555 = vcmp.eq.s32.totalorder %v1550, %v1552
      %vm1556 = vcmp.eq.s32.totalorder %v1551, %v1552
      %v1557 = vsel %vm1553, 1, 0
      %v1558 = vsel %vm1554, 1, 0
      %v1559 = vsel %vm1555, 1, 0
      %v1560 = vsel %vm1556, 1, 0
      %v1561 = vcvt.s32.f32 %v1557
      %v1562 = vcvt.s32.f32 %v1558
      %v1563 = vcvt.s32.f32 %v1559
      %v1564 = vcvt.s32.f32 %v1560
      %v1565 = vmul.f32 %v1561, 0.0625
      %v1566 = vmul.f32 %v1562, 0.0625
      %v1567 = vmul.f32 %v1563, 0.0625
      %v1568 = vmul.f32 %v1564, 0.0625
      %v1570 = vsel %vm722, %v1565, 0
      %v1573 = vsel %vm722, %v1566, 0
      %v1576 = vsel %vm722, %v1567, 0
      %v1579 = vsel %vm722, %v1568, 0
      %1581 = vmatprep.subr.mxu0 0.0
      %1582 = vmatpush1.msra.mxu0 %v1544
      %1583 = vmatprep.subr.mxu0 0.0
      %1584 = vmatpush1.msra.mxu0 %v1545
      %1585 = vmatprep.subr.mxu0 0.0
      %1586 = vmatpush1.msra.mxu0 %v1546
      %1587 = vmatprep.subr.mxu0 0.0
      %1588 = vmatpush1.msra.mxu0 %v1547
      %1589 = vmatprep.subr.mxu0 0.0
      %1590 = vmatpush1.msra.mxu0 0.0
      %1591 = vmatprep.subr.mxu0 0.0
      %1592 = vmatpush1.msra.mxu0 0.0
      %1593 = vmatprep.subr.mxu0 0.0
      %1594 = vmatpush1.msra.mxu0 0.0
      %1595 = vmatprep.subr.mxu0 0.0
      %1596 = vmatpush1.msra.mxu0 0.0
      %1597 = vmatprep.subr.mxu0 0.0
      %1598 = vmatpush1.msra.mxu0 0.0
      %1599 = vmatprep.subr.mxu0 0.0
      %1600 = vmatpush1.msra.mxu0 0.0
      %1601 = vmatprep.subr.mxu0 0.0
      %1602 = vmatpush1.msra.mxu0 0.0
      %1603 = vmatprep.subr.mxu0 0.0
      %1604 = vmatpush1.msra.mxu0 0.0
      %1605 = vmatprep.subr.mxu0 0.0
      %1606 = vmatpush1.msra.mxu0 0.0
      %1607 = vmatprep.subr.mxu0 0.0
      %1608 = vmatpush1.msra.mxu0 0.0
      %1609 = vmatprep.subr.mxu0 0.0
      %1610 = vmatpush1.msra.mxu0 0.0
      %1611 = vmatprep.subr.mxu0 0.0
      %1612 = vmatpush1.msra.mxu0 0.0
      %1613 = vmatprep.subr.mxu0 0.0
      %1614 = vmatpush1.msra.mxu0 0.0
      %1615 = vmatprep.subr.mxu0 0.0
      %1616 = vmatpush1.msra.mxu0 0.0
      %1617 = vmatprep.subr.mxu0 0.0
      %1618 = vmatpush1.msra.mxu0 0.0
      %1619 = vmatprep.subr.mxu0 0.0
      %1620 = vmatpush1.msra.mxu0 0.0
      %1621 = vmatprep.subr.mxu0 0.0
      %1622 = vmatpush1.msra.mxu0 0.0
      %1623 = vmatprep.subr.mxu0 0.0
      %1624 = vmatpush1.msra.mxu0 0.0
      %1625 = vmatprep.subr.mxu0 0.0
      %1626 = vmatpush1.msra.mxu0 0.0
      %1627 = vmatprep.subr.mxu0 0.0
      %1628 = vmatpush1.msra.mxu0 0.0
      %1629 = vmatprep.subr.mxu0 0.0
      %1630 = vmatpush1.msra.mxu0 0.0
      %1631 = vmatprep.subr.mxu0 0.0
      %1632 = vmatpush1.msra.mxu0 0.0
      %1633 = vmatprep.subr.mxu0 0.0
      %1634 = vmatpush1.msra.mxu0 0.0
      %1635 = vmatprep.subr.mxu0 0.0
      %1636 = vmatpush1.msra.mxu0 0.0
      %1637 = vmatprep.subr.mxu0 0.0
      %1638 = vmatpush1.msra.mxu0 0.0
      %1639 = vmatprep.subr.mxu0 0.0
      %1640 = vmatpush1.msra.mxu0 0.0
      %1641 = vmatprep.subr.mxu0 0.0
      %1642 = vmatpush1.msra.mxu0 0.0
      %1643 = vmatprep.subr.mxu0 0.0
      %1644 = vmatpush1.msra.mxu0 0.0
      %1645 = vmatprep.mubr.f32.mxu0 0.0
      %1646 = vmatmul.mubr.f32.gmra.mrb[0].mxu0 %v1570
      %v1647 = vpop.f32.mrb[0].mxu0
      %v1648 = vadd.f32 0.0, %v1647
      %v1649 = vpop.f32.mrb[0].mxu0
      %1650 = vmatprep.mubr.f32.mxu0 0.0
      %1651 = vmatmul.mubr.f32.gmra.mrb[0].mxu0 %v1573
      %v1652 = vpop.f32.mrb[0].mxu0
      %v1653 = vadd.f32 0.0, %v1652
      %v1654 = vpop.f32.mrb[0].mxu0
      %1655 = vmatprep.mubr.f32.mxu0 0.0
      %1656 = vmatmul.mubr.f32.gmra.mrb[0].mxu0 %v1576
      %v1657 = vpop.f32.mrb[0].mxu0
      %v1658 = vadd.f32 0.0, %v1657
      %v1659 = vpop.f32.mrb[0].mxu0
      %1660 = vmatprep.mubr.f32.mxu0 0.0
      %1661 = vmatmul.mubr.f32.gmra.mrb[0].mxu0 %v1579
      %v1662 = vpop.f32.mrb[0].mxu0
      %v1663 = vadd.f32 0.0, %v1662
      %v1664 = vpop.f32.mrb[0].mxu0
      %1665 = vdwg.mxu0
      %v1666 = vsub.f32 %v1544, %v1648
      %v1667 = vsub.f32 %v1545, %v1653
      %v1668 = vsub.f32 %v1546, %v1658
      %v1669 = vsub.f32 %v1547, %v1663
      %v1670 = vmul.f32 %v1666, %v1666
      %v1671 = vmul.f32 %v1667, %v1667
      %v1672 = vmul.f32 %v1668, %v1668
      %v1673 = vmul.f32 %v1669, %v1669
      %1674 = vmatprep.subr.mxu0 0.0
      %1675 = vmatpush1.msra.mxu0 %v1670
      %1676 = vmatprep.subr.mxu0 0.0
      %1677 = vmatpush1.msra.mxu0 %v1671
      %1678 = vmatprep.subr.mxu0 0.0
      %1679 = vmatpush1.msra.mxu0 %v1672
      %1680 = vmatprep.subr.mxu0 0.0
      %1681 = vmatpush1.msra.mxu0 %v1673
      %1682 = vmatprep.subr.mxu0 0.0
      %1683 = vmatpush1.msra.mxu0 0.0
      %1684 = vmatprep.subr.mxu0 0.0
      %1685 = vmatpush1.msra.mxu0 0.0
      %1686 = vmatprep.subr.mxu0 0.0
      %1687 = vmatpush1.msra.mxu0 0.0
      %1688 = vmatprep.subr.mxu0 0.0
      %1689 = vmatpush1.msra.mxu0 0.0
      %1690 = vmatprep.subr.mxu0 0.0
      %1691 = vmatpush1.msra.mxu0 0.0
      %1692 = vmatprep.subr.mxu0 0.0
      %1693 = vmatpush1.msra.mxu0 0.0
      %1694 = vmatprep.subr.mxu0 0.0
      %1695 = vmatpush1.msra.mxu0 0.0
      %1696 = vmatprep.subr.mxu0 0.0
      %1697 = vmatpush1.msra.mxu0 0.0
      %1698 = vmatprep.subr.mxu0 0.0
      %1699 = vmatpush1.msra.mxu0 0.0
      %1700 = vmatprep.subr.mxu0 0.0
      %1701 = vmatpush1.msra.mxu0 0.0
      %1702 = vmatprep.subr.mxu0 0.0
      %1703 = vmatpush1.msra.mxu0 0.0
      %1704 = vmatprep.subr.mxu0 0.0
      %1705 = vmatpush1.msra.mxu0 0.0
      %1706 = vmatprep.subr.mxu0 0.0
      %1707 = vmatpush1.msra.mxu0 0.0
      %1708 = vmatprep.subr.mxu0 0.0
      %1709 = vmatpush1.msra.mxu0 0.0
      %1710 = vmatprep.subr.mxu0 0.0
      %1711 = vmatpush1.msra.mxu0 0.0
      %1712 = vmatprep.subr.mxu0 0.0
      %1713 = vmatpush1.msra.mxu0 0.0
      %1714 = vmatprep.subr.mxu0 0.0
      %1715 = vmatpush1.msra.mxu0 0.0
      %1716 = vmatprep.subr.mxu0 0.0
      %1717 = vmatpush1.msra.mxu0 0.0
      %1718 = vmatprep.subr.mxu0 0.0
      %1719 = vmatpush1.msra.mxu0 0.0
      %1720 = vmatprep.subr.mxu0 0.0
      %1721 = vmatpush1.msra.mxu0 0.0
      %1722 = vmatprep.subr.mxu0 0.0
      %1723 = vmatpush1.msra.mxu0 0.0
      %1724 = vmatprep.subr.mxu0 0.0
      %1725 = vmatpush1.msra.mxu0 0.0
      %1726 = vmatprep.subr.mxu0 0.0
      %1727 = vmatpush1.msra.mxu0 0.0
      %1728 = vmatprep.subr.mxu0 0.0
      %1729 = vmatpush1.msra.mxu0 0.0
      %1730 = vmatprep.subr.mxu0 0.0
      %1731 = vmatpush1.msra.mxu0 0.0
      %1732 = vmatprep.subr.mxu0 0.0
      %1733 = vmatpush1.msra.mxu0 0.0
      %1734 = vmatprep.subr.mxu0 0.0
      %1735 = vmatpush1.msra.mxu0 0.0
      %1736 = vmatprep.subr.mxu0 0.0
      %1737 = vmatpush1.msra.mxu0 0.0
      %1738 = vmatprep.mubr.f32.mxu0 0.0
      %1739 = vmatmul.mubr.f32.gmra.mrb[0].mxu0 %v1570
      %v1740 = vpop.f32.mrb[0].mxu0
      %v1741 = vadd.f32 1e-05, %v1740
      %v1742 = vpop.f32.mrb[0].mxu0
      %1743 = vmatprep.mubr.f32.mxu0 0.0
      %1744 = vmatmul.mubr.f32.gmra.mrb[0].mxu0 %v1573
      %v1745 = vpop.f32.mrb[0].mxu0
      %v1746 = vadd.f32 1e-05, %v1745
      %v1747 = vpop.f32.mrb[0].mxu0
      %1748 = vmatprep.mubr.f32.mxu0 0.0
      %1749 = vmatmul.mubr.f32.gmra.mrb[0].mxu0 %v1576
      %v1750 = vpop.f32.mrb[0].mxu0
      %v1751 = vadd.f32 1e-05, %v1750
      %v1752 = vpop.f32.mrb[0].mxu0
      %1753 = vmatprep.mubr.f32.mxu0 0.0
      %1754 = vmatmul.mubr.f32.gmra.mrb[0].mxu0 %v1579
      %v1755 = vpop.f32.mrb[0].mxu0
      %v1756 = vadd.f32 1e-05, %v1755
      %v1757 = vpop.f32.mrb[0].mxu0
      %1758 = vdwg.mxu0
      %v1759 = vrsqrt.pop %v1741
      %v1760 = vrsqrt.pop %v1746
      %v1761 = vrsqrt.pop %v1751
      %v1762 = vrsqrt.pop %v1756
      %v1763 = vmul.f32 %v1666, %v1759
      %v1764 = vmul.f32 %v1667, %v1760
      %v1765 = vmul.f32 %v1668, %v1761
      %v1766 = vmul.f32 %v1669, %v1762
      %v1767 = vlaneseq
      %v1768 = vshrl.u32 %v1767, 7
      %v1769 = vsub.s32 0, %v1768
      %v1770 = vrot.slane %v268, %v1769
      %v1771 = vmul.f32 %v1763, %v1770
      %v1772 = vmul.f32 %v1764, %v1770
      %v1773 = vmul.f32 %v1765, %v1770
      %v1774 = vmul.f32 %v1766, %v1770
      %v1775 = vlaneseq
      %v1776 = vshrl.u32 %v1775, 7
      %v1777 = vsub.s32 0, %v1776
      %v1778 = vrot.slane %v269, %v1777
      %v1779 = vadd.f32 %v1771, %v1778
      %v1780 = vadd.f32 %v1772, %v1778
      %v1781 = vadd.f32 %v1773, %v1778
      %v1782 = vadd.f32 %v1774, %v1778
      %v1783 = vmax.f32 %v1779, 0.0
      %v1784 = vmax.f32 %v1780, 0.0
      %v1785 = vmax.f32 %v1781, 0.0
      %v1786 = vmax.f32 %v1782, 0.0
      %v1787 = vadd.f32 %v232, %v1783
      %v1788 = vadd.f32 %v233, %v1784
      %v1789 = vadd.f32 %v234, %v1785
      %v1790 = vadd.f32 %v235, %v1786
      %1791 = vst.msk [vmem:[%s231] sm:$0xff] %vm884, %v1787
      %1792 = vst.msk [vmem:[%s231 + $0x8] sm:$0xff] %vm884, %v1788
      %1793 = vst.msk [vmem:[%s231 + $0x10] sm:$0xff] %vm884, %v1789
      %1794 = vst.msk [vmem:[%s231 + $0x18] sm:$0xff] %vm884, %v1790
      %p1795 = scmp.lt.s32.totalorder %s15, 1
      %s1796 = scalar_select %p1795, %s15, 1
      %s1797 = smul.addr %s1796, 4
      %s1798 = smul.addr %s1797, 8
      %s1799 = scalar_lea.vmem %s4, %s1798
      // Predicated region
      $region37: #{res_graph_conv_lyr.1} parent=35 // pred_check
        %p1800 = pneg %p132
      $region38: #{res_graph_conv_lyr.1} parent=35 // pred_check_branch
        %1802 = sbr.rel (%p1800) target = $region40
      $region39: #{res_graph_conv_lyr.1} parent=35 // pred_region
        _
      $region40: #{res_graph_conv_lyr.1} parent=35 // pred_fallthru
        _
    $region36: #{res_graph_conv_lyr.1} parent=5 // pred_fallthru
      _
    %p1803 = scmp.le.s32.totalorder 2, %s10
    // Predicated region
    $region41: #{res_graph_conv_lyr.1} parent=5 // pred_check
      %p1804 = pneg %p1803
    $region42: #{res_graph_conv_lyr.1} parent=5 // pred_check_branch
      %1806 = sbr.rel (%p1804) target = $region44
    $region43: #{res_graph_conv_lyr.1} parent=5 // pred_region
      %s1807 = ssub.s32 %s10, 2
      // Predicated region
      $region45: #{res_graph_conv_lyr.1} parent=43 // pred_check
        %p1808 = pneg %p138
      $region46: #{res_graph_conv_lyr.1} parent=43 // pred_check_branch
        %1810 = sbr.rel (%p1808) target = $region48
      $region47: #{res_graph_conv_lyr.1} parent=43 // pred_region
        %p1811 = scmp.lt.s32.totalorder %s16, 1
        %s1812 = scalar_select %p1811, %s16, 1
        %s1813 = smul.addr %s1812, 4
        %s1814 = smul.addr %s1813, 8
        %s1815 = scalar_lea.vmem %s4, %s1814
      $region48: #{res_graph_conv_lyr.1} parent=43 // pred_fallthru
        _
    $region44: #{res_graph_conv_lyr.1} parent=5 // pred_fallthru
      _
  $region6: #{res_graph_conv_lyr.1} parent=0 // loop_footer
    %s14 = sadd.s32 1, %s10
  $region7: #{res_graph_conv_lyr.1} parent=0 // loop_footer_branch
    %9 = sbr.rel target = $region3
  $region8: #{res_graph_conv_lyr.1} parent=0 // loop_exit
    _

</llo_original>
